<compile_context>
chip_gen: v6e
topology: v6e:2x2x1
jax: 0.10.0
libtpu: 0.0.40
codegen_flags: <defaults>
</compile_context>

<pallas_src>
import functools

import jax
import jax.numpy as jnp
from jax.experimental import pallas as pl
from jax.experimental.pallas import tpu as pltpu


def _round_up(x, m):
    return (x + m - 1) // m * m


def convbn_kernel(x_ref, w_ref, b_ref, o_ref, *, kh, kw, th, ow, stride, dilation):
    """One grid step: a band of TH output rows of one image.

    x_ref : (HP, WP, Cin)     bf16 -- whole padded image (resident per image)
    w_ref : (KH*KW*Cin, OCp)  bf16 -- BN-scale-folded weights (VMEM resident)
    b_ref : (1, OCp)          f32  -- folded BN bias
    o_ref : (TH, OW, OCp)          -- one band of output rows
    """
    t = pl.program_id(1)
    row0 = pl.multiple_of(t * (th * stride), th * stride)

    wpad = x_ref.shape[1]
    cin = x_ref.shape[2]
    ocp = o_ref.shape[-1]

    pieces = []
    for i in range(kh):                                   # static unroll over KH taps
        rstart = row0 + i * dilation
        if stride == 1:
            rows = x_ref[pl.ds(rstart, th), :, :]                       # (TH, WP, Cin)
        else:
            # contiguous load + reshape de-interleave (no strided slice).
            rows = x_ref[pl.ds(rstart, th * stride), :, :]
            rows = rows.reshape(th, stride, wpad, cin)[:, 0]
        for j in range(kw):                               # static unroll over KW taps
            cstart = j * dilation
            if stride == 1:
                cols = rows[:, cstart:cstart + ow, :]                   # (TH, OW, Cin)
            else:
                cols = rows[:, cstart:cstart + ow * stride, :]
                cols = cols.reshape(th, ow, stride, cin)[:, :, 0, :]
            pieces.append(cols)

    # im2col band built in VMEM (no HBM traffic): (TH*OW, KH*KW*Cin).
    lhs = jnp.concatenate(pieces, axis=-1).reshape(th * ow, kh * kw * cin)
    # Single MXU matmul per step, f32 accumulation.
    acc = jnp.dot(lhs, w_ref[...], preferred_element_type=jnp.float32)  # (M, OCp)
    acc = acc + b_ref[...]                                # BN bias; nonlinear=Identity
    o_ref[...] = acc.reshape(th, ow, ocp).astype(o_ref.dtype)


@functools.partial(jax.jit, static_argnames=("stride", "padding", "dilation", "eps"))
def convbn_forward(x, weight, gamma, beta, running_mean, running_var,
                   *, stride=1, padding=1, dilation=1, eps=1e-5):
    """ConvBN forward (groups=1). x: [N, Cin, H, W] NCHW, weight: [OC, Cin, KH, KW]."""
    oc, cin, kh, kw = weight.shape
    n, _, h, w = x.shape
    oh = (h + 2 * padding - dilation * (kh - 1) - 1) // stride + 1
    ow = (w + 2 * padding - dilation * (kw - 1) - 1) // stride + 1

    # Lane padding only when OC is already large; small-OC layers keep true OC
    # to avoid inflating output HBM writes (feedback: conditional lane padding).
    ocp = _round_up(oc, 128) if oc >= 128 else oc

    # --- pick row-band size TH so M = TH*OW ~ 256, bounded by a per-step VMEM
    #     working-set budget that stays comfortable on every generation (v7x 64MiB).
    k = kh * kw * cin
    out_itemsize = jnp.dtype(x.dtype).itemsize

    def _step_bytes(t):
        m = t * ow
        return m * k * 2 + m * ocp * 4 + 2 * t * ow * ocp * out_itemsize

    th = max(1, min(oh, -(-256 // ow)))
    while th > 1 and _step_bytes(th) > 8 * 1024 * 1024:
        th -= 1
    ntiles = -(-oh // th)
    ohp = ntiles * th

    # --- input prep: NCHW -> NHWC, spatial zero-pad, bf16 MXU operand
    #     (single fused wrapper pass under jit).
    hp = max(h + 2 * padding, ohp * stride + (kh - 1) * dilation)
    wp = max(w + 2 * padding, ow * stride + (kw - 1) * dilation)
    x_nhwc = jnp.transpose(x, (0, 2, 3, 1))
    xp = jnp.pad(x_nhwc, ((0, 0),
                          (padding, hp - h - padding),
                          (padding, wp - w - padding),
                          (0, 0))).astype(jnp.bfloat16)

    # --- fold BN (running stats) into the conv: scale into weights, bias separate.
    scale = gamma / jnp.sqrt(running_var + eps)                    # (OC,)
    bias = beta - running_mean * scale                             # (OC,)
    w_hwio = jnp.transpose(weight, (2, 3, 1, 0)) * scale           # (KH, KW, Cin, OC)
    w_mat = jnp.pad(w_hwio, ((0, 0), (0, 0), (0, 0), (0, ocp - oc)))
    w_mat = w_mat.reshape(kh * kw * cin, ocp).astype(jnp.bfloat16)  # matches concat order
    bias_p = jnp.pad(bias, (0, ocp - oc)).reshape(1, ocp).astype(jnp.float32)

    kernel = functools.partial(convbn_kernel, kh=kh, kw=kw, th=th, ow=ow,
                               stride=stride, dilation=dilation)

    # Real DMA pattern: input once per image, weights/bias once, output once.
    flops = 2 * n * ohp * ow * k * ocp
    bytes_accessed = (n * hp * wp * cin * 2
                      + k * ocp * 2 + ocp * 4
                      + n * ohp * ow * ocp * out_itemsize)

    # VMEM estimate (double-buffered blocks + per-step working set); raise the
    # scoped limit only if needed so the v7x 64 MiB part stays comfortable.
    vmem_est = (2 * hp * wp * cin * 2 + 2 * k * ocp * 2 + 2 * ocp * 4
                + 2 * th * ow * ocp * out_itemsize + _step_bytes(th))
    cp_kwargs = dict(dimension_semantics=("parallel", "parallel"))
    if vmem_est > 30 * 1024 * 1024:
        cp_kwargs["vmem_limit_bytes"] = int(min(vmem_est * 2, 120 * 1024 * 1024))

    out = pl.pallas_call(
        kernel,
        out_shape=jax.ShapeDtypeStruct((n, ohp, ow, ocp), x.dtype),
        grid_spec=pltpu.PrefetchScalarGridSpec(
            num_scalar_prefetch=0,
            grid=(n, ntiles),
            in_specs=[
                # whole padded image; block index only changes with b (t is the
                # inner grid axis) -> DMA'd once per image, reused across row tiles.
                pl.BlockSpec((None, hp, wp, cin), lambda b, t: (b, 0, 0, 0)),
                # full folded weight matrix, constant index -> VMEM-resident.
                pl.BlockSpec((kh * kw * cin, ocp), lambda b, t: (0, 0)),
                # folded BN bias, constant index -> resident.
                pl.BlockSpec((1, ocp), lambda b, t: (0, 0)),
            ],
            out_specs=pl.BlockSpec((None, th, ow, ocp), lambda b, t: (b, t, 0, 0)),
        ),
        compiler_params=pltpu.CompilerParams(**cp_kwargs),
        cost_estimate=pl.CostEstimate(flops=flops, transcendentals=0,
                                      bytes_accessed=bytes_accessed),
    )(xp, w_mat, bias_p)

    out = out[:, :oh, :, :oc]                  # drop row-tile / OC padding (if any)
    # Module semantics: PyTorch forward returns NCHW.
    return jnp.transpose(out, (0, 3, 1, 2))


def _reference(x, weight, gamma, beta, running_mean, running_var,
               *, stride=1, padding=1, dilation=1, eps=1e-5):
    y = jax.lax.conv_general_dilated(
        x, weight,
        window_strides=(stride, stride),
        padding=[(padding, padding), (padding, padding)],
        rhs_dilation=(dilation, dilation),
        dimension_numbers=("NCHW", "OIHW", "NCHW"))
    scale = (gamma / jnp.sqrt(running_var + eps)).reshape(1, -1, 1, 1)
    bias = (beta - running_mean * gamma / jnp.sqrt(running_var + eps)).reshape(1, -1, 1, 1)
    return y * scale + bias


if __name__ == "__main__":
    # ConvBN(in_channels=4, out_channels=8, kernel_size=3, stride=1, padding=1,
    #        dilation=1, groups=1, deploy=False, nonlinear=None)
    N, CIN, H, W = 2, 4, 16, 16
    OC, KH, KW = 8, 3, 3

    key = jax.random.PRNGKey(0)
    kx, kw_, kg, kb, km, kv = jax.random.split(key, 6)

    x = jax.random.normal(kx, (N, CIN, H, W), dtype=jnp.float32)
    weight = jax.random.normal(kw_, (OC, CIN, KH, KW), dtype=jnp.float32) * 0.1
    gamma = 1.0 + 0.1 * jax.random.normal(kg, (OC,), dtype=jnp.float32)
    beta = 0.1 * jax.random.normal(kb, (OC,), dtype=jnp.float32)
    running_mean = 0.1 * jax.random.normal(km, (OC,), dtype=jnp.float32)
    running_var = jnp.abs(jax.random.normal(kv, (OC,), dtype=jnp.float32)) + 0.5

    out = convbn_forward(x, weight, gamma, beta, running_mean, running_var,
                         stride=1, padding=1, dilation=1)
    out = jax.block_until_ready(out)

    ref = _reference(x, weight, gamma, beta, running_mean, running_var,
                     stride=1, padding=1, dilation=1)
    assert out.shape == (N, OC, H, W), out.shape
    # bf16 MXU operands (f32 accumulate) -> slightly looser tolerance than pure-f32.
    max_err = float(jnp.max(jnp.abs(out - ref)))
    assert jnp.allclose(out, ref, rtol=2e-2, atol=2e-2), max_err

    print("KERNEL_OK")
</pallas_src>

<mosaic_0001>
module attributes {stable_mosaic.version = 11 : i64} {
  func.func @convbn_kernel(%arg0: i32, %arg1: i32, %arg2: memref<1x18x18x4xbf16, #tpu.memory_space<vmem>>, %arg3: memref<36x8xbf16, #tpu.memory_space<vmem>>, %arg4: memref<1x8xf32, #tpu.memory_space<vmem>>, %arg5: memref<1x16x16x8xf32, #tpu.memory_space<vmem>>) attributes {dimension_semantics = [#tpu.dimension_semantics<parallel>, #tpu.dimension_semantics<parallel>], iteration_bounds = array<i64: 2, 1>, scalar_prefetch = 0 : i64, scratch_operands = 0 : i64, tpu.core_type = #tpu.core_type<tc>, window_params = [{transform_indices = @transform_0, window_bounds = array<i64: 1, 18, 18, 4>}, {pipeline_mode = #tpu.pipeline_mode<synchronous>, transform_indices = @transform_1, window_bounds = array<i64: 36, 8>}, {pipeline_mode = #tpu.pipeline_mode<synchronous>, transform_indices = @transform_2, window_bounds = array<i64: 1, 8>}, {transform_indices = @transform_3, window_bounds = array<i64: 1, 16, 16, 8>}]} {
    %c16_i32 = arith.constant 16 : i32
    %0 = arith.muli %arg1, %c16_i32 : i32
    %1 = tpu.assume_multiple %0, 16 : i32
    %c0_i32 = arith.constant 0 : i32
    %2 = arith.addi %1, %c0_i32 : i32
    %c0 = arith.constant 0 : index
    %3 = arith.index_cast %2 : i32 to index
    %c0_0 = arith.constant 0 : index
    %c0_1 = arith.constant 0 : index
    %4 = vector.load %arg2[%c0, %3, %c0_0, %c0_1] : memref<1x18x18x4xbf16, #tpu.memory_space<vmem>>, vector<1x16x18x4xbf16>
    %5 = vector.shape_cast %4 : vector<1x16x18x4xbf16> to vector<16x18x4xbf16>
    %6 = vector.extract_strided_slice %5 {offsets = [0, 0, 0], sizes = [16, 16, 4], strides = [1, 1, 1]} : vector<16x18x4xbf16> to vector<16x16x4xbf16>
    %7 = vector.extract_strided_slice %5 {offsets = [0, 1, 0], sizes = [16, 16, 4], strides = [1, 1, 1]} : vector<16x18x4xbf16> to vector<16x16x4xbf16>
    %8 = vector.extract_strided_slice %5 {offsets = [0, 2, 0], sizes = [16, 16, 4], strides = [1, 1, 1]} : vector<16x18x4xbf16> to vector<16x16x4xbf16>
    %c1_i32 = arith.constant 1 : i32
    %9 = arith.addi %1, %c1_i32 : i32
    %c0_2 = arith.constant 0 : index
    %10 = arith.index_cast %9 : i32 to index
    %c0_3 = arith.constant 0 : index
    %c0_4 = arith.constant 0 : index
    %11 = vector.load %arg2[%c0_2, %10, %c0_3, %c0_4] : memref<1x18x18x4xbf16, #tpu.memory_space<vmem>>, vector<1x16x18x4xbf16>
    %12 = vector.shape_cast %11 : vector<1x16x18x4xbf16> to vector<16x18x4xbf16>
    %13 = vector.extract_strided_slice %12 {offsets = [0, 0, 0], sizes = [16, 16, 4], strides = [1, 1, 1]} : vector<16x18x4xbf16> to vector<16x16x4xbf16>
    %14 = vector.extract_strided_slice %12 {offsets = [0, 1, 0], sizes = [16, 16, 4], strides = [1, 1, 1]} : vector<16x18x4xbf16> to vector<16x16x4xbf16>
    %15 = vector.extract_strided_slice %12 {offsets = [0, 2, 0], sizes = [16, 16, 4], strides = [1, 1, 1]} : vector<16x18x4xbf16> to vector<16x16x4xbf16>
    %c2_i32 = arith.constant 2 : i32
    %16 = arith.addi %1, %c2_i32 : i32
    %c0_5 = arith.constant 0 : index
    %17 = arith.index_cast %16 : i32 to index
    %c0_6 = arith.constant 0 : index
    %c0_7 = arith.constant 0 : index
    %18 = vector.load %arg2[%c0_5, %17, %c0_6, %c0_7] : memref<1x18x18x4xbf16, #tpu.memory_space<vmem>>, vector<1x16x18x4xbf16>
    %19 = vector.shape_cast %18 : vector<1x16x18x4xbf16> to vector<16x18x4xbf16>
    %20 = vector.extract_strided_slice %19 {offsets = [0, 0, 0], sizes = [16, 16, 4], strides = [1, 1, 1]} : vector<16x18x4xbf16> to vector<16x16x4xbf16>
    %21 = vector.extract_strided_slice %19 {offsets = [0, 1, 0], sizes = [16, 16, 4], strides = [1, 1, 1]} : vector<16x18x4xbf16> to vector<16x16x4xbf16>
    %22 = vector.extract_strided_slice %19 {offsets = [0, 2, 0], sizes = [16, 16, 4], strides = [1, 1, 1]} : vector<16x18x4xbf16> to vector<16x16x4xbf16>
    %23 = tpu.concatenate %6, %7, %8, %13, %14, %15, %20, %21, %22 in 2 : vector<16x16x4xbf16>, vector<16x16x4xbf16>, vector<16x16x4xbf16>, vector<16x16x4xbf16>, vector<16x16x4xbf16>, vector<16x16x4xbf16>, vector<16x16x4xbf16>, vector<16x16x4xbf16>, vector<16x16x4xbf16> -> vector<16x16x36xbf16>
    %24 = vector.shape_cast %23 : vector<16x16x36xbf16> to vector<256x36xbf16>
    %c0_8 = arith.constant 0 : index
    %c0_9 = arith.constant 0 : index
    %25 = vector.load %arg3[%c0_8, %c0_9] : memref<36x8xbf16, #tpu.memory_space<vmem>>, vector<36x8xbf16>
    %cst = arith.constant dense<0.000000e+00> : vector<256x8xf32>
    %26 = tpu.matmul %24, %25, %cst {dimension_numbers = #tpu.dot_dimension_numbers<[1], [0], [0], [1], [0, 0, 1, 1], [], []>} : vector<256x36xbf16>, vector<36x8xbf16>, vector<256x8xf32> -> vector<256x8xf32>
    %c0_10 = arith.constant 0 : index
    %c0_11 = arith.constant 0 : index
    %27 = vector.load %arg4[%c0_10, %c0_11] : memref<1x8xf32, #tpu.memory_space<vmem>>, vector<1x8xf32>
    %28 = vector.broadcast %27 : vector<1x8xf32> to vector<256x8xf32>
    %29 = arith.addf %26, %28 : vector<256x8xf32>
    %30 = vector.shape_cast %29 : vector<256x8xf32> to vector<16x16x8xf32>
    %c0_12 = arith.constant 0 : index
    %c0_13 = arith.constant 0 : index
    %c0_14 = arith.constant 0 : index
    %c0_15 = arith.constant 0 : index
    %31 = vector.load %arg5[%c0_12, %c0_13, %c0_14, %c0_15] : memref<1x16x16x8xf32, #tpu.memory_space<vmem>>, vector<1x16x16x8xf32>
    %32 = vector.shape_cast %31 : vector<1x16x16x8xf32> to vector<16x16x8xf32>
    %33 = vector.shape_cast %30 : vector<16x16x8xf32> to vector<1x16x16x8xf32>
    tpu.vector_store %arg5[%c0_12, %c0_13, %c0_14, %c0_15], %33 {strides = array<i32>} : memref<1x16x16x8xf32, #tpu.memory_space<vmem>>, vector<1x16x16x8xf32>,
    return
  }
  func.func @transform_0(%arg0: i32, %arg1: i32) -> (i32, i32, i32, i32) {
    %c0_i32 = arith.constant 0 : i32
    %c0_i32_0 = arith.constant 0 : i32
    %c0_i32_1 = arith.constant 0 : i32
    %c0_i32_2 = arith.constant 0 : i32
    return %arg0, %c0_i32, %c0_i32_0, %c0_i32_1 : i32, i32, i32, i32
  }
  func.func @transform_1(%arg0: i32, %arg1: i32) -> (i32, i32) {
    %c0_i32 = arith.constant 0 : i32
    %c0_i32_0 = arith.constant 0 : i32
    %c0_i32_1 = arith.constant 0 : i32
    return %c0_i32, %c0_i32_0 : i32, i32
  }
  func.func @transform_2(%arg0: i32, %arg1: i32) -> (i32, i32) {
    %c0_i32 = arith.constant 0 : i32
    %c0_i32_0 = arith.constant 0 : i32
    %c0_i32_1 = arith.constant 0 : i32
    return %c0_i32, %c0_i32_0 : i32, i32
  }
  func.func @transform_3(%arg0: i32, %arg1: i32) -> (i32, i32, i32, i32) {
    %c0_i32 = arith.constant 0 : i32
    %c0_i32_0 = arith.constant 0 : i32
    %c0_i32_1 = arith.constant 0 : i32
    return %arg0, %arg1, %c0_i32, %c0_i32_0 : i32, i32, i32, i32
  }
}

</mosaic_0001>

<llo_original>
// kernel: convbn_forward.1
$region0: #{convbn_forward.1}
  #allocation0 [shape = 'u32[]', space=smem, size = 0x4, offset = 0x4, fixed_abs, tag = 'smem constant byte address 0x4 - core index']
  #allocation1 [shape = 'u32[144,128]{1,0:T(1,128)}', space=vmem, size = 0x12000, scoped, tag = 'internal scratch']
  %s0 = inlined_call_operand.vmem [shape: bf16[2,18,18,4], index: 0, kind: input, shape index: {}]
  %s1 = inlined_call_operand.vmem [shape: bf16[36,8], index: 1, kind: input, shape index: {}]
  %s2 = inlined_call_operand.vmem [shape: f32[1,8], index: 2, kind: input, shape index: {}]
  %s3 = inlined_call_operand.vmem [shape: f32[2,16,16,8], index: 3, kind: output, shape index: {}]
  %s4 = sld [smem:[#allocation0]]
  $region45: #{convbn_forward.1} parent=0
    _
  %s6 = ssub.s32 1, %s4
  %s7 = scalar_select 0, %s6, %s4
  loop: start=0, step=1, limit=4
  $region2: #{convbn_forward.1} parent=0 // loop_pre_header
    _
  $region3: #{convbn_forward.1} parent=0 // loop_header
    %s9 = sphi 0, %s13
    %p10 = scmp.ge.s32.totalorder %s9, 4
    %s16 = sphi 0, %s28
    %s17 = sphi 0, %s24
    %s18 = sphi 0, %s16
    %s19 = sphi 0, %s17
    %s20 = sphi 0, %s18
    %s21 = sphi 0, %s19
    %s31 = sphi 0, %s33
    %s34 = sphi 0, %s31
    %s35 = sphi 0, %s34
    %s51 = sphi 0, %s35
    %s55 = sphi 0, %s55
    %s57 = sphi 0, %s55
    %s58 = sphi 0, %s57
    %s72 = sphi 0, %s58
    %s76 = sphi 0, %s76
    %s78 = sphi 0, %s76
    %s79 = sphi 0, %s78
    %s93 = sphi 0, %s79
    %s101 = sphi 0, %s103
    %s104 = sphi 0, %s101
    %s105 = sphi 0, %s104
    %s121 = sphi 0, %s105
  $region4: #{convbn_forward.1} parent=0 // loop_header_branch
    %12 = sbr.rel (%p10) target = $region8
  $region5: #{convbn_forward.1} parent=0 // loop_body
    %s14 = ssub.s32 %s9, 1
    %s15 = ssub.s32 %s9, 2
    %s22 = sadd.s32 1, %s17
    %p23 = scmp.ge.s32.totalorder %s22, 1
    %s24 = scalar_select %p23, 0, %s22
    %s25 = sadd.s32 1, %s16
    %s26 = scalar_select %p23, %s25, %s16
    %p27 = scmp.ge.s32.totalorder %s26, 2
    %s28 = scalar_select %p27, 0, %s26
    %s29 = ssub.s32 %s16, %s28
    %p30 = scmp.eq.s32.totalorder %s29, 0
    %s32 = sadd.s32 %s31, 1
    %s33 = scalar_select %p30, %s31, %s32
    %p36 = pneg %p30
    %p37 = scmp.eq.s32.totalorder %s9, 1
    %p38 = por %p36, %p37
    %p39 = scmp.ne.s32.totalorder %s31, %s34
    %p40 = scmp.eq.s32.totalorder %s9, 0
    %p41 = por %p39, %p40
    %p42 = scmp.ne.s32.totalorder %s31, %s34
    %p43 = scmp.eq.s32.totalorder %s14, 1
    %p44 = por %p42, %p43
    %p45 = scmp.ne.s32.totalorder %s34, %s35
    %p46 = scmp.eq.s32.totalorder %s14, 0
    %p47 = por %p45, %p46
    %p48 = scmp.ne.s32.totalorder %s34, %s35
    %p49 = scmp.eq.s32.totalorder %s15, 1
    %p50 = por %p48, %p49
    %p52 = scmp.ne.s32.totalorder %s35, %s51
    %p53 = scmp.eq.s32.totalorder %s15, 0
    %p54 = por %p52, %p53
    %s56 = sadd.s32 %s55, 1
    %p59 = scmp.eq.s32.totalorder %s9, 1
    %p60 = scmp.ne.s32.totalorder %s55, %s57
    %p61 = scmp.eq.s32.totalorder %s9, 0
    %p62 = por %p60, %p61
    %p63 = scmp.ne.s32.totalorder %s55, %s57
    %p64 = scmp.eq.s32.totalorder %s14, 1
    %p65 = por %p63, %p64
    %p66 = scmp.ne.s32.totalorder %s57, %s58
    %p67 = scmp.eq.s32.totalorder %s14, 0
    %p68 = por %p66, %p67
    %p69 = scmp.ne.s32.totalorder %s57, %s58
    %p70 = scmp.eq.s32.totalorder %s15, 1
    %p71 = por %p69, %p70
    %p73 = scmp.ne.s32.totalorder %s58, %s72
    %p74 = scmp.eq.s32.totalorder %s15, 0
    %p75 = por %p73, %p74
    %s77 = sadd.s32 %s76, 1
    %p80 = scmp.eq.s32.totalorder %s9, 1
    %p81 = scmp.ne.s32.totalorder %s76, %s78
    %p82 = scmp.eq.s32.totalorder %s9, 0
    %p83 = por %p81, %p82
    %p84 = scmp.ne.s32.totalorder %s76, %s78
    %p85 = scmp.eq.s32.totalorder %s14, 1
    %p86 = por %p84, %p85
    %p87 = scmp.ne.s32.totalorder %s78, %s79
    %p88 = scmp.eq.s32.totalorder %s14, 0
    %p89 = por %p87, %p88
    %p90 = scmp.ne.s32.totalorder %s78, %s79
    %p91 = scmp.eq.s32.totalorder %s15, 1
    %p92 = por %p90, %p91
    %p94 = scmp.ne.s32.totalorder %s79, %s93
    %p95 = scmp.eq.s32.totalorder %s15, 0
    %p96 = por %p94, %p95
    %s97 = ssub.s32 %s16, %s28
    %s98 = ssub.s32 %s17, %s24
    %s99 = sor.u32 %s97, %s98
    %p100 = scmp.eq.s32.totalorder %s99, 0
    %s102 = sadd.s32 %s101, 1
    %s103 = scalar_select %p100, %s101, %s102
    %p106 = pneg %p100
    %p107 = scmp.eq.s32.totalorder %s9, 1
    %p108 = por %p106, %p107
    %p109 = scmp.ne.s32.totalorder %s101, %s104
    %p110 = scmp.eq.s32.totalorder %s9, 0
    %p111 = por %p109, %p110
    %p112 = scmp.ne.s32.totalorder %s101, %s104
    %p113 = scmp.eq.s32.totalorder %s14, 1
    %p114 = por %p112, %p113
    %p115 = scmp.ne.s32.totalorder %s104, %s105
    %p116 = scmp.eq.s32.totalorder %s14, 0
    %p117 = por %p115, %p116
    %p118 = scmp.ne.s32.totalorder %s104, %s105
    %p119 = scmp.eq.s32.totalorder %s15, 1
    %p120 = por %p118, %p119
    %p122 = scmp.ne.s32.totalorder %s105, %s121
    %p123 = scmp.eq.s32.totalorder %s15, 0
    %p124 = por %p122, %p123
    %p125 = scmp.le.s32.totalorder 1, %s9
    %p126 = scmp.lt.s32.totalorder %s9, 3
    %p127 = pnand %p125, %p126
    %p128 = pneg %p127
    // Predicated region
    $region9: #{convbn_forward.1} parent=5 // pred_check
      _
    $region10: #{convbn_forward.1} parent=5 // pred_check_branch
      %130 = sbr.rel (%p127) target = $region12
    $region11: #{convbn_forward.1} parent=5 // pred_region
      %s131 = ssub.s32 %s9, 1
      // Predicated region
      $region13: #{convbn_forward.1} parent=11 // pred_check
        %p132 = pneg %p68
      $region14: #{convbn_forward.1} parent=11 // pred_check_branch
        %134 = sbr.rel (%p132) target = $region16
      $region15: #{convbn_forward.1} parent=11 // pred_region
        _
      $region16: #{convbn_forward.1} parent=11 // pred_fallthru
        _
      // Predicated region
      $region17: #{convbn_forward.1} parent=11 // pred_check
        %p135 = pneg %p89
      $region18: #{convbn_forward.1} parent=11 // pred_check_branch
        %137 = sbr.rel (%p135) target = $region20
      $region19: #{convbn_forward.1} parent=11 // pred_region
        _
      $region20: #{convbn_forward.1} parent=11 // pred_fallthru
        _
    $region12: #{convbn_forward.1} parent=5 // pred_fallthru
      _
    %p138 = scmp.lt.s32.totalorder %s9, 2
    // Predicated region
    $region21: #{convbn_forward.1} parent=5 // pred_check
      %p139 = pneg %p138
    $region22: #{convbn_forward.1} parent=5 // pred_check_branch
      %141 = sbr.rel (%p139) target = $region24
    $region23: #{convbn_forward.1} parent=5 // pred_region
      // Predicated region
      $region25: #{convbn_forward.1} parent=23 // pred_check
        %p142 = pneg %p41
      $region26: #{convbn_forward.1} parent=23 // pred_check_branch
        %144 = sbr.rel (%p142) target = $region28
      $region27: #{convbn_forward.1} parent=23 // pred_region
        %p145 = scmp.lt.s32.totalorder %s16, 1
        %s146 = scalar_select %p145, %s16, 1
        %s147 = smul.addr %s146, 54
        %s148 = smul.addr %s147, 4
        %s149 = scalar_lea.vmem %s0, %s148
      $region28: #{convbn_forward.1} parent=23 // pred_fallthru
        _
    $region24: #{convbn_forward.1} parent=5 // pred_fallthru
      _
    %p150 = scmp.le.s32.totalorder 1, %s9
    %p151 = scmp.lt.s32.totalorder %s9, 3
    %p152 = pnand %p150, %p151
    %p153 = pneg %p152
    // Predicated region
    $region29: #{convbn_forward.1} parent=5 // pred_check
      _
    $region30: #{convbn_forward.1} parent=5 // pred_check_branch
      %155 = sbr.rel (%p152) target = $region32
    $region31: #{convbn_forward.1} parent=5 // pred_region
      %s156 = ssub.s32 %s9, 1
      %p157 = scmp.lt.s32.totalorder %s18, 1
      %s158 = scalar_select %p157, %s18, 1
      %s159 = smul.addr %s158, 54
      %s160 = smul.addr %s159, 4
      %s161 = scalar_lea.vmem %s0, %s160
      %p162 = pneg %p47
      %p163 = pneg %p44
      %p164 = pneg %p68
      %p165 = pneg %p65
      %p166 = pneg %p89
      %p167 = pneg %p86
      %p168 = pneg %p117
      %p169 = pneg %p114
      %s170 = smul.u32 16, %s19
      %p171 = scmp.lt.s32.totalorder %s18, 1
      %s172 = scalar_select %p171, %s18, 1
      %p173 = scmp.lt.s32.totalorder %s170, 15
      %s174 = scalar_select %p173, %s170, 15
      %s175 = smul.addr %s174, 2
      %s176 = smul.addr %s172, 32
      %s177 = sadd.s32 %s175, %s176
      %s178 = smul.addr %s177, 8
      %s179 = scalar_lea.vmem %s3, %s178
      %p180 = scmp.lt.s32.totalorder %s18, 1
      %s181 = scalar_select %p180, %s18, 1
      %s182 = smul.addr %s181, 54
      %s183 = smul.addr %s182, 4
      %s184 = scalar_lea.vmem %s0, %s183
      %s185 = smul.u32 16, %s19
      %p186 = scmp.lt.s32.totalorder %s18, 1
      %s187 = scalar_select %p186, %s18, 1
      %p188 = scmp.lt.s32.totalorder %s185, 15
      %s189 = scalar_select %p188, %s185, 15
      %s190 = smul.addr %s189, 2
      %s191 = smul.addr %s187, 32
      %s192 = sadd.s32 %s190, %s191
      %s193 = smul.addr %s192, 8
      %s194 = scalar_lea.vmem %s3, %s193
      %s195 = smul.u32 16, %s19
      %s197 = smul.u32 %s19, 16
      %s198 = smul.u32 %s197, 3
      %s199 = smul.addr %s198, 4
      %s200 = scalar_lea.vmem %s184, %s199
      %v201 = vld [vmem:[%s200] sm:$0xf]
      %v202 = vld [vmem:[%s200 + $0x4] sm:$0xf]
      %v203 = vld [vmem:[%s200 + $0x8] sm:$0x1]
      %v204 = vld [vmem:[%s200 + $0xc] sm:$0xf]
      %v205 = vld [vmem:[%s200 + $0x10] sm:$0xf]
      %v206 = vld [vmem:[%s200 + $0x14] sm:$0x1]
      %v207 = vld [vmem:[%s200 + $0x18] sm:$0xf]
      %v208 = vld [vmem:[%s200 + $0x1c] sm:$0xf]
      %v209 = vld [vmem:[%s200 + $0x20] sm:$0x1]
      %v210 = vld [vmem:[%s200 + $0x24] sm:$0xf]
      %v211 = vld [vmem:[%s200 + $0x28] sm:$0xf]
      %v212 = vld [vmem:[%s200 + $0x2c] sm:$0x1]
      %v213 = vld [vmem:[%s200 + $0x30] sm:$0xf]
      %v214 = vld [vmem:[%s200 + $0x34] sm:$0xf]
      %v215 = vld [vmem:[%s200 + $0x38] sm:$0x1]
      %v216 = vld [vmem:[%s200 + $0x3c] sm:$0xf]
      %v217 = vld [vmem:[%s200 + $0x40] sm:$0xf]
      %v218 = vld [vmem:[%s200 + $0x44] sm:$0x1]
      %v219 = vld [vmem:[%s200 + $0x48] sm:$0xf]
      %v220 = vld [vmem:[%s200 + $0x4c] sm:$0xf]
      %v221 = vld [vmem:[%s200 + $0x50] sm:$0x1]
      %v222 = vld [vmem:[%s200 + $0x54] sm:$0xf]
      %v223 = vld [vmem:[%s200 + $0x58] sm:$0xf]
      %v224 = vld [vmem:[%s200 + $0x5c] sm:$0x1]
      %v225 = vld [vmem:[%s200 + $0x60] sm:$0xf]
      %v226 = vld [vmem:[%s200 + $0x64] sm:$0xf]
      %v227 = vld [vmem:[%s200 + $0x68] sm:$0x1]
      %v228 = vld [vmem:[%s200 + $0x6c] sm:$0xf]
      %v229 = vld [vmem:[%s200 + $0x70] sm:$0xf]
      %v230 = vld [vmem:[%s200 + $0x74] sm:$0x1]
      %v231 = vld [vmem:[%s200 + $0x78] sm:$0xf]
      %v232 = vld [vmem:[%s200 + $0x7c] sm:$0xf]
      %v233 = vld [vmem:[%s200 + $0x80] sm:$0x1]
      %v234 = vld [vmem:[%s200 + $0x84] sm:$0xf]
      %v235 = vld [vmem:[%s200 + $0x88] sm:$0xf]
      %v236 = vld [vmem:[%s200 + $0x8c] sm:$0x1]
      %v237 = vld [vmem:[%s200 + $0x90] sm:$0xf]
      %v238 = vld [vmem:[%s200 + $0x94] sm:$0xf]
      %v239 = vld [vmem:[%s200 + $0x98] sm:$0x1]
      %v240 = vld [vmem:[%s200 + $0x9c] sm:$0xf]
      %v241 = vld [vmem:[%s200 + $0xa0] sm:$0xf]
      %v242 = vld [vmem:[%s200 + $0xa4] sm:$0x1]
      %v243 = vld [vmem:[%s200 + $0xa8] sm:$0xf]
      %v244 = vld [vmem:[%s200 + $0xac] sm:$0xf]
      %v245 = vld [vmem:[%s200 + $0xb0] sm:$0x1]
      %v246 = vld [vmem:[%s200 + $0xb4] sm:$0xf]
      %v247 = vld [vmem:[%s200 + $0xb8] sm:$0xf]
      %v248 = vld [vmem:[%s200 + $0xbc] sm:$0x1]
      %s249 = sadd.s32 %s197, 1
      %s250 = smul.u32 %s249, 3
      %s251 = smul.addr %s250, 4
      %s252 = scalar_lea.vmem %s184, %s251
      %v253 = vld [vmem:[%s252] sm:$0xf]
      %v254 = vld [vmem:[%s252 + $0x4] sm:$0xf]
      %v255 = vld [vmem:[%s252 + $0x8] sm:$0x1]
      %v256 = vld [vmem:[%s252 + $0xc] sm:$0xf]
      %v257 = vld [vmem:[%s252 + $0x10] sm:$0xf]
      %v258 = vld [vmem:[%s252 + $0x14] sm:$0x1]
      %v259 = vld [vmem:[%s252 + $0x18] sm:$0xf]
      %v260 = vld [vmem:[%s252 + $0x1c] sm:$0xf]
      %v261 = vld [vmem:[%s252 + $0x20] sm:$0x1]
      %v262 = vld [vmem:[%s252 + $0x24] sm:$0xf]
      %v263 = vld [vmem:[%s252 + $0x28] sm:$0xf]
      %v264 = vld [vmem:[%s252 + $0x2c] sm:$0x1]
      %v265 = vld [vmem:[%s252 + $0x30] sm:$0xf]
      %v266 = vld [vmem:[%s252 + $0x34] sm:$0xf]
      %v267 = vld [vmem:[%s252 + $0x38] sm:$0x1]
      %v268 = vld [vmem:[%s252 + $0x3c] sm:$0xf]
      %v269 = vld [vmem:[%s252 + $0x40] sm:$0xf]
      %v270 = vld [vmem:[%s252 + $0x44] sm:$0x1]
      %v271 = vld [vmem:[%s252 + $0x48] sm:$0xf]
      %v272 = vld [vmem:[%s252 + $0x4c] sm:$0xf]
      %v273 = vld [vmem:[%s252 + $0x50] sm:$0x1]
      %v274 = vld [vmem:[%s252 + $0x54] sm:$0xf]
      %v275 = vld [vmem:[%s252 + $0x58] sm:$0xf]
      %v276 = vld [vmem:[%s252 + $0x5c] sm:$0x1]
      %v277 = vld [vmem:[%s252 + $0x60] sm:$0xf]
      %v278 = vld [vmem:[%s252 + $0x64] sm:$0xf]
      %v279 = vld [vmem:[%s252 + $0x68] sm:$0x1]
      %v280 = vld [vmem:[%s252 + $0x6c] sm:$0xf]
      %v281 = vld [vmem:[%s252 + $0x70] sm:$0xf]
      %v282 = vld [vmem:[%s252 + $0x74] sm:$0x1]
      %v283 = vld [vmem:[%s252 + $0x78] sm:$0xf]
      %v284 = vld [vmem:[%s252 + $0x7c] sm:$0xf]
      %v285 = vld [vmem:[%s252 + $0x80] sm:$0x1]
      %v286 = vld [vmem:[%s252 + $0x84] sm:$0xf]
      %v287 = vld [vmem:[%s252 + $0x88] sm:$0xf]
      %v288 = vld [vmem:[%s252 + $0x8c] sm:$0x1]
      %v289 = vld [vmem:[%s252 + $0x90] sm:$0xf]
      %v290 = vld [vmem:[%s252 + $0x94] sm:$0xf]
      %v291 = vld [vmem:[%s252 + $0x98] sm:$0x1]
      %v292 = vld [vmem:[%s252 + $0x9c] sm:$0xf]
      %v293 = vld [vmem:[%s252 + $0xa0] sm:$0xf]
      %v294 = vld [vmem:[%s252 + $0xa4] sm:$0x1]
      %v295 = vld [vmem:[%s252 + $0xa8] sm:$0xf]
      %v296 = vld [vmem:[%s252 + $0xac] sm:$0xf]
      %v297 = vld [vmem:[%s252 + $0xb0] sm:$0x1]
      %v298 = vld [vmem:[%s252 + $0xb4] sm:$0xf]
      %v299 = vld [vmem:[%s252 + $0xb8] sm:$0xf]
      %v300 = vld [vmem:[%s252 + $0xbc] sm:$0x1]
      %s301 = sadd.s32 %s197, 2
      %s302 = smul.u32 %s301, 3
      %s303 = smul.addr %s302, 4
      %s304 = scalar_lea.vmem %s184, %s303
      %v305 = vld [vmem:[%s304] sm:$0xf]
      %v306 = vld [vmem:[%s304 + $0x4] sm:$0xf]
      %v307 = vld [vmem:[%s304 + $0x8] sm:$0x1]
      %v308 = vld [vmem:[%s304 + $0xc] sm:$0xf]
      %v309 = vld [vmem:[%s304 + $0x10] sm:$0xf]
      %v310 = vld [vmem:[%s304 + $0x14] sm:$0x1]
      %v311 = vld [vmem:[%s304 + $0x18] sm:$0xf]
      %v312 = vld [vmem:[%s304 + $0x1c] sm:$0xf]
      %v313 = vld [vmem:[%s304 + $0x20] sm:$0x1]
      %v314 = vld [vmem:[%s304 + $0x24] sm:$0xf]
      %v315 = vld [vmem:[%s304 + $0x28] sm:$0xf]
      %v316 = vld [vmem:[%s304 + $0x2c] sm:$0x1]
      %v317 = vld [vmem:[%s304 + $0x30] sm:$0xf]
      %v318 = vld [vmem:[%s304 + $0x34] sm:$0xf]
      %v319 = vld [vmem:[%s304 + $0x38] sm:$0x1]
      %v320 = vld [vmem:[%s304 + $0x3c] sm:$0xf]
      %v321 = vld [vmem:[%s304 + $0x40] sm:$0xf]
      %v322 = vld [vmem:[%s304 + $0x44] sm:$0x1]
      %v323 = vld [vmem:[%s304 + $0x48] sm:$0xf]
      %v324 = vld [vmem:[%s304 + $0x4c] sm:$0xf]
      %v325 = vld [vmem:[%s304 + $0x50] sm:$0x1]
      %v326 = vld [vmem:[%s304 + $0x54] sm:$0xf]
      %v327 = vld [vmem:[%s304 + $0x58] sm:$0xf]
      %v328 = vld [vmem:[%s304 + $0x5c] sm:$0x1]
      %v329 = vld [vmem:[%s304 + $0x60] sm:$0xf]
      %v330 = vld [vmem:[%s304 + $0x64] sm:$0xf]
      %v331 = vld [vmem:[%s304 + $0x68] sm:$0x1]
      %v332 = vld [vmem:[%s304 + $0x6c] sm:$0xf]
      %v333 = vld [vmem:[%s304 + $0x70] sm:$0xf]
      %v334 = vld [vmem:[%s304 + $0x74] sm:$0x1]
      %v335 = vld [vmem:[%s304 + $0x78] sm:$0xf]
      %v336 = vld [vmem:[%s304 + $0x7c] sm:$0xf]
      %v337 = vld [vmem:[%s304 + $0x80] sm:$0x1]
      %v338 = vld [vmem:[%s304 + $0x84] sm:$0xf]
      %v339 = vld [vmem:[%s304 + $0x88] sm:$0xf]
      %v340 = vld [vmem:[%s304 + $0x8c] sm:$0x1]
      %v341 = vld [vmem:[%s304 + $0x90] sm:$0xf]
      %v342 = vld [vmem:[%s304 + $0x94] sm:$0xf]
      %v343 = vld [vmem:[%s304 + $0x98] sm:$0x1]
      %v344 = vld [vmem:[%s304 + $0x9c] sm:$0xf]
      %v345 = vld [vmem:[%s304 + $0xa0] sm:$0xf]
      %v346 = vld [vmem:[%s304 + $0xa4] sm:$0x1]
      %v347 = vld [vmem:[%s304 + $0xa8] sm:$0xf]
      %v348 = vld [vmem:[%s304 + $0xac] sm:$0xf]
      %v349 = vld [vmem:[%s304 + $0xb0] sm:$0x1]
      %v350 = vld [vmem:[%s304 + $0xb4] sm:$0xf]
      %v351 = vld [vmem:[%s304 + $0xb8] sm:$0xf]
      %v352 = vld [vmem:[%s304 + $0xbc] sm:$0x1]
      %v385 = vunpack.c.l.b16 %v201
      %v386 = vunpack.c.l.b16 %v202
      %v387 = vunpack.c.l.b16 %v204
      %v388 = vunpack.c.l.b16 %v205
      %v389 = vunpack.c.l.b16 %v207
      %v390 = vunpack.c.l.b16 %v208
      %v391 = vunpack.c.l.b16 %v210
      %v392 = vunpack.c.l.b16 %v211
      %v393 = vunpack.c.l.b16 %v213
      %v394 = vunpack.c.l.b16 %v214
      %v395 = vunpack.c.l.b16 %v216
      %v396 = vunpack.c.l.b16 %v217
      %v397 = vunpack.c.l.b16 %v219
      %v398 = vunpack.c.l.b16 %v220
      %v399 = vunpack.c.l.b16 %v222
      %v400 = vunpack.c.l.b16 %v223
      %v401 = vunpack.c.l.b16 %v225
      %v402 = vunpack.c.l.b16 %v226
      %v403 = vunpack.c.l.b16 %v228
      %v404 = vunpack.c.l.b16 %v229
      %v405 = vunpack.c.l.b16 %v231
      %v406 = vunpack.c.l.b16 %v232
      %v407 = vunpack.c.l.b16 %v234
      %v408 = vunpack.c.l.b16 %v235
      %v409 = vunpack.c.l.b16 %v237
      %v410 = vunpack.c.l.b16 %v238
      %v411 = vunpack.c.l.b16 %v240
      %v412 = vunpack.c.l.b16 %v241
      %v413 = vunpack.c.l.b16 %v243
      %v414 = vunpack.c.l.b16 %v244
      %v415 = vunpack.c.l.b16 %v246
      %v416 = vunpack.c.l.b16 %v247
      %v417 = vpack.c.b16 %v386, %v385
      %v418 = vpack.c.b16 %v388, %v387
      %v419 = vpack.c.b16 %v390, %v389
      %v420 = vpack.c.b16 %v392, %v391
      %v421 = vpack.c.b16 %v394, %v393
      %v422 = vpack.c.b16 %v396, %v395
      %v423 = vpack.c.b16 %v398, %v397
      %v424 = vpack.c.b16 %v400, %v399
      %v425 = vpack.c.b16 %v402, %v401
      %v426 = vpack.c.b16 %v404, %v403
      %v427 = vpack.c.b16 %v406, %v405
      %v428 = vpack.c.b16 %v408, %v407
      %v429 = vpack.c.b16 %v410, %v409
      %v430 = vpack.c.b16 %v412, %v411
      %v431 = vpack.c.b16 %v414, %v413
      %v432 = vpack.c.b16 %v416, %v415
      %v449 = vunpack.c.l.b16 %v203
      %v450 = vunpack.c.l.b16 %v206
      %v451 = vunpack.c.l.b16 %v209
      %v452 = vunpack.c.l.b16 %v212
      %v453 = vunpack.c.l.b16 %v215
      %v454 = vunpack.c.l.b16 %v218
      %v455 = vunpack.c.l.b16 %v221
      %v456 = vunpack.c.l.b16 %v224
      %v457 = vunpack.c.l.b16 %v227
      %v458 = vunpack.c.l.b16 %v230
      %v459 = vunpack.c.l.b16 %v233
      %v460 = vunpack.c.l.b16 %v236
      %v461 = vunpack.c.l.b16 %v239
      %v462 = vunpack.c.l.b16 %v242
      %v463 = vunpack.c.l.b16 %v245
      %v464 = vunpack.c.l.b16 %v248
      %v465 = vpack.c.b16 %v449, %v449
      %v466 = vpack.c.b16 %v450, %v450
      %v467 = vpack.c.b16 %v451, %v451
      %v468 = vpack.c.b16 %v452, %v452
      %v469 = vpack.c.b16 %v453, %v453
      %v470 = vpack.c.b16 %v454, %v454
      %v471 = vpack.c.b16 %v455, %v455
      %v472 = vpack.c.b16 %v456, %v456
      %v473 = vpack.c.b16 %v457, %v457
      %v474 = vpack.c.b16 %v458, %v458
      %v475 = vpack.c.b16 %v459, %v459
      %v476 = vpack.c.b16 %v460, %v460
      %v477 = vpack.c.b16 %v461, %v461
      %v478 = vpack.c.b16 %v462, %v462
      %v479 = vpack.c.b16 %v463, %v463
      %v480 = vpack.c.b16 %v464, %v464
      %vm481 = vsmask.f32 7424
      %v483 = vshrl.u32 %v417, 16
      %v485 = vshll.u32 %v417, 16
      %v487 = vrot.slane %v485, 1
      %v488 = vor.u32 %v483, %v487
      %v490 = vshll.u32 %v465, 16
      %v492 = vrot.slane %v490, 1
      %v493 = vsel %vm481, %v488, %v492
      %v495 = vshrl.u32 %v418, 16
      %v497 = vshll.u32 %v418, 16
      %v499 = vrot.slane %v497, 1
      %v500 = vor.u32 %v495, %v499
      %v502 = vshll.u32 %v466, 16
      %v504 = vrot.slane %v502, 1
      %v505 = vsel %vm481, %v500, %v504
      %v507 = vshrl.u32 %v419, 16
      %v509 = vshll.u32 %v419, 16
      %v511 = vrot.slane %v509, 1
      %v512 = vor.u32 %v507, %v511
      %v514 = vshll.u32 %v467, 16
      %v516 = vrot.slane %v514, 1
      %v517 = vsel %vm481, %v512, %v516
      %v519 = vshrl.u32 %v420, 16
      %v521 = vshll.u32 %v420, 16
      %v523 = vrot.slane %v521, 1
      %v524 = vor.u32 %v519, %v523
      %v526 = vshll.u32 %v468, 16
      %v528 = vrot.slane %v526, 1
      %v529 = vsel %vm481, %v524, %v528
      %v531 = vshrl.u32 %v421, 16
      %v533 = vshll.u32 %v421, 16
      %v535 = vrot.slane %v533, 1
      %v536 = vor.u32 %v531, %v535
      %v538 = vshll.u32 %v469, 16
      %v540 = vrot.slane %v538, 1
      %v541 = vsel %vm481, %v536, %v540
      %v543 = vshrl.u32 %v422, 16
      %v545 = vshll.u32 %v422, 16
      %v547 = vrot.slane %v545, 1
      %v548 = vor.u32 %v543, %v547
      %v550 = vshll.u32 %v470, 16
      %v552 = vrot.slane %v550, 1
      %v553 = vsel %vm481, %v548, %v552
      %v555 = vshrl.u32 %v423, 16
      %v557 = vshll.u32 %v423, 16
      %v559 = vrot.slane %v557, 1
      %v560 = vor.u32 %v555, %v559
      %v562 = vshll.u32 %v471, 16
      %v564 = vrot.slane %v562, 1
      %v565 = vsel %vm481, %v560, %v564
      %v567 = vshrl.u32 %v424, 16
      %v569 = vshll.u32 %v424, 16
      %v571 = vrot.slane %v569, 1
      %v572 = vor.u32 %v567, %v571
      %v574 = vshll.u32 %v472, 16
      %v576 = vrot.slane %v574, 1
      %v577 = vsel %vm481, %v572, %v576
      %v579 = vshrl.u32 %v425, 16
      %v581 = vshll.u32 %v425, 16
      %v583 = vrot.slane %v581, 1
      %v584 = vor.u32 %v579, %v583
      %v586 = vshll.u32 %v473, 16
      %v588 = vrot.slane %v586, 1
      %v589 = vsel %vm481, %v584, %v588
      %v591 = vshrl.u32 %v426, 16
      %v593 = vshll.u32 %v426, 16
      %v595 = vrot.slane %v593, 1
      %v596 = vor.u32 %v591, %v595
      %v598 = vshll.u32 %v474, 16
      %v600 = vrot.slane %v598, 1
      %v601 = vsel %vm481, %v596, %v600
      %v603 = vshrl.u32 %v427, 16
      %v605 = vshll.u32 %v427, 16
      %v607 = vrot.slane %v605, 1
      %v608 = vor.u32 %v603, %v607
      %v610 = vshll.u32 %v475, 16
      %v612 = vrot.slane %v610, 1
      %v613 = vsel %vm481, %v608, %v612
      %v615 = vshrl.u32 %v428, 16
      %v617 = vshll.u32 %v428, 16
      %v619 = vrot.slane %v617, 1
      %v620 = vor.u32 %v615, %v619
      %v622 = vshll.u32 %v476, 16
      %v624 = vrot.slane %v622, 1
      %v625 = vsel %vm481, %v620, %v624
      %v627 = vshrl.u32 %v429, 16
      %v629 = vshll.u32 %v429, 16
      %v631 = vrot.slane %v629, 1
      %v632 = vor.u32 %v627, %v631
      %v634 = vshll.u32 %v477, 16
      %v636 = vrot.slane %v634, 1
      %v637 = vsel %vm481, %v632, %v636
      %v639 = vshrl.u32 %v430, 16
      %v641 = vshll.u32 %v430, 16
      %v643 = vrot.slane %v641, 1
      %v644 = vor.u32 %v639, %v643
      %v646 = vshll.u32 %v478, 16
      %v648 = vrot.slane %v646, 1
      %v649 = vsel %vm481, %v644, %v648
      %v651 = vshrl.u32 %v431, 16
      %v653 = vshll.u32 %v431, 16
      %v655 = vrot.slane %v653, 1
      %v656 = vor.u32 %v651, %v655
      %v658 = vshll.u32 %v479, 16
      %v660 = vrot.slane %v658, 1
      %v661 = vsel %vm481, %v656, %v660
      %v663 = vshrl.u32 %v432, 16
      %v665 = vshll.u32 %v432, 16
      %v667 = vrot.slane %v665, 1
      %v668 = vor.u32 %v663, %v667
      %v670 = vshll.u32 %v480, 16
      %v672 = vrot.slane %v670, 1
      %v673 = vsel %vm481, %v668, %v672
      %674 = vrot.lane.b32.xlu0 %v493, 4
      %v675 = vpop.permute.xlu0 %674
      %676 = vrot.lane.b32.xlu0 %v505, 4
      %v677 = vpop.permute.xlu0 %676
      %678 = vrot.lane.b32.xlu0 %v517, 4
      %v679 = vpop.permute.xlu0 %678
      %680 = vrot.lane.b32.xlu0 %v529, 4
      %v681 = vpop.permute.xlu0 %680
      %682 = vrot.lane.b32.xlu0 %v541, 4
      %v683 = vpop.permute.xlu0 %682
      %684 = vrot.lane.b32.xlu0 %v553, 4
      %v685 = vpop.permute.xlu0 %684
      %686 = vrot.lane.b32.xlu0 %v565, 4
      %v687 = vpop.permute.xlu0 %686
      %688 = vrot.lane.b32.xlu0 %v577, 4
      %v689 = vpop.permute.xlu0 %688
      %690 = vrot.lane.b32.xlu0 %v589, 4
      %v691 = vpop.permute.xlu0 %690
      %692 = vrot.lane.b32.xlu0 %v601, 4
      %v693 = vpop.permute.xlu0 %692
      %694 = vrot.lane.b32.xlu0 %v613, 4
      %v695 = vpop.permute.xlu0 %694
      %696 = vrot.lane.b32.xlu0 %v625, 4
      %v697 = vpop.permute.xlu0 %696
      %698 = vrot.lane.b32.xlu0 %v637, 4
      %v699 = vpop.permute.xlu0 %698
      %700 = vrot.lane.b32.xlu0 %v649, 4
      %v701 = vpop.permute.xlu0 %700
      %702 = vrot.lane.b32.xlu0 %v661, 4
      %v703 = vpop.permute.xlu0 %702
      %704 = vrot.lane.b32.xlu0 %v673, 4
      %v705 = vpop.permute.xlu0 %704
      %vm706 = vcmask 1046528
      %v707 = vrot.slane %v417, 1
      %v708 = vrot.slane %v465, 1
      %v709 = vsel %vm706, %v707, %v708
      %v710 = vrot.slane %v418, 1
      %v711 = vrot.slane %v466, 1
      %v712 = vsel %vm706, %v710, %v711
      %v713 = vrot.slane %v419, 1
      %v714 = vrot.slane %v467, 1
      %v715 = vsel %vm706, %v713, %v714
      %v716 = vrot.slane %v420, 1
      %v717 = vrot.slane %v468, 1
      %v718 = vsel %vm706, %v716, %v717
      %v719 = vrot.slane %v421, 1
      %v720 = vrot.slane %v469, 1
      %v721 = vsel %vm706, %v719, %v720
      %v722 = vrot.slane %v422, 1
      %v723 = vrot.slane %v470, 1
      %v724 = vsel %vm706, %v722, %v723
      %v725 = vrot.slane %v423, 1
      %v726 = vrot.slane %v471, 1
      %v727 = vsel %vm706, %v725, %v726
      %v728 = vrot.slane %v424, 1
      %v729 = vrot.slane %v472, 1
      %v730 = vsel %vm706, %v728, %v729
      %v731 = vrot.slane %v425, 1
      %v732 = vrot.slane %v473, 1
      %v733 = vsel %vm706, %v731, %v732
      %v734 = vrot.slane %v426, 1
      %v735 = vrot.slane %v474, 1
      %v736 = vsel %vm706, %v734, %v735
      %v737 = vrot.slane %v427, 1
      %v738 = vrot.slane %v475, 1
      %v739 = vsel %vm706, %v737, %v738
      %v740 = vrot.slane %v428, 1
      %v741 = vrot.slane %v476, 1
      %v742 = vsel %vm706, %v740, %v741
      %v743 = vrot.slane %v429, 1
      %v744 = vrot.slane %v477, 1
      %v745 = vsel %vm706, %v743, %v744
      %v746 = vrot.slane %v430, 1
      %v747 = vrot.slane %v478, 1
      %v748 = vsel %vm706, %v746, %v747
      %v749 = vrot.slane %v431, 1
      %v750 = vrot.slane %v479, 1
      %v751 = vsel %vm706, %v749, %v750
      %v752 = vrot.slane %v432, 1
      %v753 = vrot.slane %v480, 1
      %v754 = vsel %vm706, %v752, %v753
      %755 = vrot.lane.b32.xlu0 %v709, 8
      %v756 = vpop.permute.xlu0 %755
      %757 = vrot.lane.b32.xlu0 %v712, 8
      %v758 = vpop.permute.xlu0 %757
      %759 = vrot.lane.b32.xlu0 %v715, 8
      %v760 = vpop.permute.xlu0 %759
      %761 = vrot.lane.b32.xlu0 %v718, 8
      %v762 = vpop.permute.xlu0 %761
      %763 = vrot.lane.b32.xlu0 %v721, 8
      %v764 = vpop.permute.xlu0 %763
      %765 = vrot.lane.b32.xlu0 %v724, 8
      %v766 = vpop.permute.xlu0 %765
      %767 = vrot.lane.b32.xlu0 %v727, 8
      %v768 = vpop.permute.xlu0 %767
      %769 = vrot.lane.b32.xlu0 %v730, 8
      %v770 = vpop.permute.xlu0 %769
      %771 = vrot.lane.b32.xlu0 %v733, 8
      %v772 = vpop.permute.xlu0 %771
      %773 = vrot.lane.b32.xlu0 %v736, 8
      %v774 = vpop.permute.xlu0 %773
      %775 = vrot.lane.b32.xlu0 %v739, 8
      %v776 = vpop.permute.xlu0 %775
      %777 = vrot.lane.b32.xlu0 %v742, 8
      %v778 = vpop.permute.xlu0 %777
      %779 = vrot.lane.b32.xlu0 %v745, 8
      %v780 = vpop.permute.xlu0 %779
      %781 = vrot.lane.b32.xlu0 %v748, 8
      %v782 = vpop.permute.xlu0 %781
      %783 = vrot.lane.b32.xlu0 %v751, 8
      %v784 = vpop.permute.xlu0 %783
      %785 = vrot.lane.b32.xlu0 %v754, 8
      %v786 = vpop.permute.xlu0 %785
      %v819 = vunpack.c.l.b16 %v253
      %v820 = vunpack.c.l.b16 %v254
      %v821 = vunpack.c.l.b16 %v256
      %v822 = vunpack.c.l.b16 %v257
      %v823 = vunpack.c.l.b16 %v259
      %v824 = vunpack.c.l.b16 %v260
      %v825 = vunpack.c.l.b16 %v262
      %v826 = vunpack.c.l.b16 %v263
      %v827 = vunpack.c.l.b16 %v265
      %v828 = vunpack.c.l.b16 %v266
      %v829 = vunpack.c.l.b16 %v268
      %v830 = vunpack.c.l.b16 %v269
      %v831 = vunpack.c.l.b16 %v271
      %v832 = vunpack.c.l.b16 %v272
      %v833 = vunpack.c.l.b16 %v274
      %v834 = vunpack.c.l.b16 %v275
      %v835 = vunpack.c.l.b16 %v277
      %v836 = vunpack.c.l.b16 %v278
      %v837 = vunpack.c.l.b16 %v280
      %v838 = vunpack.c.l.b16 %v281
      %v839 = vunpack.c.l.b16 %v283
      %v840 = vunpack.c.l.b16 %v284
      %v841 = vunpack.c.l.b16 %v286
      %v842 = vunpack.c.l.b16 %v287
      %v843 = vunpack.c.l.b16 %v289
      %v844 = vunpack.c.l.b16 %v290
      %v845 = vunpack.c.l.b16 %v292
      %v846 = vunpack.c.l.b16 %v293
      %v847 = vunpack.c.l.b16 %v295
      %v848 = vunpack.c.l.b16 %v296
      %v849 = vunpack.c.l.b16 %v298
      %v850 = vunpack.c.l.b16 %v299
      %v851 = vpack.c.b16 %v820, %v819
      %v852 = vpack.c.b16 %v822, %v821
      %v853 = vpack.c.b16 %v824, %v823
      %v854 = vpack.c.b16 %v826, %v825
      %v855 = vpack.c.b16 %v828, %v827
      %v856 = vpack.c.b16 %v830, %v829
      %v857 = vpack.c.b16 %v832, %v831
      %v858 = vpack.c.b16 %v834, %v833
      %v859 = vpack.c.b16 %v836, %v835
      %v860 = vpack.c.b16 %v838, %v837
      %v861 = vpack.c.b16 %v840, %v839
      %v862 = vpack.c.b16 %v842, %v841
      %v863 = vpack.c.b16 %v844, %v843
      %v864 = vpack.c.b16 %v846, %v845
      %v865 = vpack.c.b16 %v848, %v847
      %v866 = vpack.c.b16 %v850, %v849
      %867 = vrot.lane.b32.xlu0 %v851, 12
      %v868 = vpop.permute.xlu0 %867
      %869 = vrot.lane.b32.xlu0 %v852, 12
      %v870 = vpop.permute.xlu0 %869
      %871 = vrot.lane.b32.xlu0 %v853, 12
      %v872 = vpop.permute.xlu0 %871
      %873 = vrot.lane.b32.xlu0 %v854, 12
      %v874 = vpop.permute.xlu0 %873
      %875 = vrot.lane.b32.xlu0 %v855, 12
      %v876 = vpop.permute.xlu0 %875
      %877 = vrot.lane.b32.xlu0 %v856, 12
      %v878 = vpop.permute.xlu0 %877
      %879 = vrot.lane.b32.xlu0 %v857, 12
      %v880 = vpop.permute.xlu0 %879
      %881 = vrot.lane.b32.xlu0 %v858, 12
      %v882 = vpop.permute.xlu0 %881
      %883 = vrot.lane.b32.xlu0 %v859, 12
      %v884 = vpop.permute.xlu0 %883
      %885 = vrot.lane.b32.xlu0 %v860, 12
      %v886 = vpop.permute.xlu0 %885
      %887 = vrot.lane.b32.xlu0 %v861, 12
      %v888 = vpop.permute.xlu0 %887
      %889 = vrot.lane.b32.xlu0 %v862, 12
      %v890 = vpop.permute.xlu0 %889
      %891 = vrot.lane.b32.xlu0 %v863, 12
      %v892 = vpop.permute.xlu0 %891
      %893 = vrot.lane.b32.xlu0 %v864, 12
      %v894 = vpop.permute.xlu0 %893
      %895 = vrot.lane.b32.xlu0 %v865, 12
      %v896 = vpop.permute.xlu0 %895
      %897 = vrot.lane.b32.xlu0 %v866, 12
      %v898 = vpop.permute.xlu0 %897
      %v915 = vunpack.c.l.b16 %v255
      %v916 = vunpack.c.l.b16 %v258
      %v917 = vunpack.c.l.b16 %v261
      %v918 = vunpack.c.l.b16 %v264
      %v919 = vunpack.c.l.b16 %v267
      %v920 = vunpack.c.l.b16 %v270
      %v921 = vunpack.c.l.b16 %v273
      %v922 = vunpack.c.l.b16 %v276
      %v923 = vunpack.c.l.b16 %v279
      %v924 = vunpack.c.l.b16 %v282
      %v925 = vunpack.c.l.b16 %v285
      %v926 = vunpack.c.l.b16 %v288
      %v927 = vunpack.c.l.b16 %v291
      %v928 = vunpack.c.l.b16 %v294
      %v929 = vunpack.c.l.b16 %v297
      %v930 = vunpack.c.l.b16 %v300
      %v931 = vpack.c.b16 %v915, %v915
      %v932 = vpack.c.b16 %v916, %v916
      %v933 = vpack.c.b16 %v917, %v917
      %v934 = vpack.c.b16 %v918, %v918
      %v935 = vpack.c.b16 %v919, %v919
      %v936 = vpack.c.b16 %v920, %v920
      %v937 = vpack.c.b16 %v921, %v921
      %v938 = vpack.c.b16 %v922, %v922
      %v939 = vpack.c.b16 %v923, %v923
      %v940 = vpack.c.b16 %v924, %v924
      %v941 = vpack.c.b16 %v925, %v925
      %v942 = vpack.c.b16 %v926, %v926
      %v943 = vpack.c.b16 %v927, %v927
      %v944 = vpack.c.b16 %v928, %v928
      %v945 = vpack.c.b16 %v929, %v929
      %v946 = vpack.c.b16 %v930, %v930
      %v948 = vshrl.u32 %v851, 16
      %v950 = vshll.u32 %v851, 16
      %v952 = vrot.slane %v950, 1
      %v953 = vor.u32 %v948, %v952
      %v955 = vshll.u32 %v931, 16
      %v957 = vrot.slane %v955, 1
      %v958 = vsel %vm481, %v953, %v957
      %v960 = vshrl.u32 %v852, 16
      %v962 = vshll.u32 %v852, 16
      %v964 = vrot.slane %v962, 1
      %v965 = vor.u32 %v960, %v964
      %v967 = vshll.u32 %v932, 16
      %v969 = vrot.slane %v967, 1
      %v970 = vsel %vm481, %v965, %v969
      %v972 = vshrl.u32 %v853, 16
      %v974 = vshll.u32 %v853, 16
      %v976 = vrot.slane %v974, 1
      %v977 = vor.u32 %v972, %v976
      %v979 = vshll.u32 %v933, 16
      %v981 = vrot.slane %v979, 1
      %v982 = vsel %vm481, %v977, %v981
      %v984 = vshrl.u32 %v854, 16
      %v986 = vshll.u32 %v854, 16
      %v988 = vrot.slane %v986, 1
      %v989 = vor.u32 %v984, %v988
      %v991 = vshll.u32 %v934, 16
      %v993 = vrot.slane %v991, 1
      %v994 = vsel %vm481, %v989, %v993
      %v996 = vshrl.u32 %v855, 16
      %v998 = vshll.u32 %v855, 16
      %v1000 = vrot.slane %v998, 1
      %v1001 = vor.u32 %v996, %v1000
      %v1003 = vshll.u32 %v935, 16
      %v1005 = vrot.slane %v1003, 1
      %v1006 = vsel %vm481, %v1001, %v1005
      %v1008 = vshrl.u32 %v856, 16
      %v1010 = vshll.u32 %v856, 16
      %v1012 = vrot.slane %v1010, 1
      %v1013 = vor.u32 %v1008, %v1012
      %v1015 = vshll.u32 %v936, 16
      %v1017 = vrot.slane %v1015, 1
      %v1018 = vsel %vm481, %v1013, %v1017
      %v1020 = vshrl.u32 %v857, 16
      %v1022 = vshll.u32 %v857, 16
      %v1024 = vrot.slane %v1022, 1
      %v1025 = vor.u32 %v1020, %v1024
      %v1027 = vshll.u32 %v937, 16
      %v1029 = vrot.slane %v1027, 1
      %v1030 = vsel %vm481, %v1025, %v1029
      %v1032 = vshrl.u32 %v858, 16
      %v1034 = vshll.u32 %v858, 16
      %v1036 = vrot.slane %v1034, 1
      %v1037 = vor.u32 %v1032, %v1036
      %v1039 = vshll.u32 %v938, 16
      %v1041 = vrot.slane %v1039, 1
      %v1042 = vsel %vm481, %v1037, %v1041
      %v1044 = vshrl.u32 %v859, 16
      %v1046 = vshll.u32 %v859, 16
      %v1048 = vrot.slane %v1046, 1
      %v1049 = vor.u32 %v1044, %v1048
      %v1051 = vshll.u32 %v939, 16
      %v1053 = vrot.slane %v1051, 1
      %v1054 = vsel %vm481, %v1049, %v1053
      %v1056 = vshrl.u32 %v860, 16
      %v1058 = vshll.u32 %v860, 16
      %v1060 = vrot.slane %v1058, 1
      %v1061 = vor.u32 %v1056, %v1060
      %v1063 = vshll.u32 %v940, 16
      %v1065 = vrot.slane %v1063, 1
      %v1066 = vsel %vm481, %v1061, %v1065
      %v1068 = vshrl.u32 %v861, 16
      %v1070 = vshll.u32 %v861, 16
      %v1072 = vrot.slane %v1070, 1
      %v1073 = vor.u32 %v1068, %v1072
      %v1075 = vshll.u32 %v941, 16
      %v1077 = vrot.slane %v1075, 1
      %v1078 = vsel %vm481, %v1073, %v1077
      %v1080 = vshrl.u32 %v862, 16
      %v1082 = vshll.u32 %v862, 16
      %v1084 = vrot.slane %v1082, 1
      %v1085 = vor.u32 %v1080, %v1084
      %v1087 = vshll.u32 %v942, 16
      %v1089 = vrot.slane %v1087, 1
      %v1090 = vsel %vm481, %v1085, %v1089
      %v1092 = vshrl.u32 %v863, 16
      %v1094 = vshll.u32 %v863, 16
      %v1096 = vrot.slane %v1094, 1
      %v1097 = vor.u32 %v1092, %v1096
      %v1099 = vshll.u32 %v943, 16
      %v1101 = vrot.slane %v1099, 1
      %v1102 = vsel %vm481, %v1097, %v1101
      %v1104 = vshrl.u32 %v864, 16
      %v1106 = vshll.u32 %v864, 16
      %v1108 = vrot.slane %v1106, 1
      %v1109 = vor.u32 %v1104, %v1108
      %v1111 = vshll.u32 %v944, 16
      %v1113 = vrot.slane %v1111, 1
      %v1114 = vsel %vm481, %v1109, %v1113
      %v1116 = vshrl.u32 %v865, 16
      %v1118 = vshll.u32 %v865, 16
      %v1120 = vrot.slane %v1118, 1
      %v1121 = vor.u32 %v1116, %v1120
      %v1123 = vshll.u32 %v945, 16
      %v1125 = vrot.slane %v1123, 1
      %v1126 = vsel %vm481, %v1121, %v1125
      %v1128 = vshrl.u32 %v866, 16
      %v1130 = vshll.u32 %v866, 16
      %v1132 = vrot.slane %v1130, 1
      %v1133 = vor.u32 %v1128, %v1132
      %v1135 = vshll.u32 %v946, 16
      %v1137 = vrot.slane %v1135, 1
      %v1138 = vsel %vm481, %v1133, %v1137
      %1139 = vrot.lane.b32.xlu0 %v958, 16
      %v1140 = vpop.permute.xlu0 %1139
      %1141 = vrot.lane.b32.xlu0 %v970, 16
      %v1142 = vpop.permute.xlu0 %1141
      %1143 = vrot.lane.b32.xlu0 %v982, 16
      %v1144 = vpop.permute.xlu0 %1143
      %1145 = vrot.lane.b32.xlu0 %v994, 16
      %v1146 = vpop.permute.xlu0 %1145
      %1147 = vrot.lane.b32.xlu0 %v1006, 16
      %v1148 = vpop.permute.xlu0 %1147
      %1149 = vrot.lane.b32.xlu0 %v1018, 16
      %v1150 = vpop.permute.xlu0 %1149
      %1151 = vrot.lane.b32.xlu0 %v1030, 16
      %v1152 = vpop.permute.xlu0 %1151
      %1153 = vrot.lane.b32.xlu0 %v1042, 16
      %v1154 = vpop.permute.xlu0 %1153
      %1155 = vrot.lane.b32.xlu0 %v1054, 16
      %v1156 = vpop.permute.xlu0 %1155
      %1157 = vrot.lane.b32.xlu0 %v1066, 16
      %v1158 = vpop.permute.xlu0 %1157
      %1159 = vrot.lane.b32.xlu0 %v1078, 16
      %v1160 = vpop.permute.xlu0 %1159
      %1161 = vrot.lane.b32.xlu0 %v1090, 16
      %v1162 = vpop.permute.xlu0 %1161
      %1163 = vrot.lane.b32.xlu0 %v1102, 16
      %v1164 = vpop.permute.xlu0 %1163
      %1165 = vrot.lane.b32.xlu0 %v1114, 16
      %v1166 = vpop.permute.xlu0 %1165
      %1167 = vrot.lane.b32.xlu0 %v1126, 16
      %v1168 = vpop.permute.xlu0 %1167
      %1169 = vrot.lane.b32.xlu0 %v1138, 16
      %v1170 = vpop.permute.xlu0 %1169
      %v1171 = vrot.slane %v851, 1
      %v1172 = vrot.slane %v931, 1
      %v1173 = vsel %vm706, %v1171, %v1172
      %v1174 = vrot.slane %v852, 1
      %v1175 = vrot.slane %v932, 1
      %v1176 = vsel %vm706, %v1174, %v1175
      %v1177 = vrot.slane %v853, 1
      %v1178 = vrot.slane %v933, 1
      %v1179 = vsel %vm706, %v1177, %v1178
      %v1180 = vrot.slane %v854, 1
      %v1181 = vrot.slane %v934, 1
      %v1182 = vsel %vm706, %v1180, %v1181
      %v1183 = vrot.slane %v855, 1
      %v1184 = vrot.slane %v935, 1
      %v1185 = vsel %vm706, %v1183, %v1184
      %v1186 = vrot.slane %v856, 1
      %v1187 = vrot.slane %v936, 1
      %v1188 = vsel %vm706, %v1186, %v1187
      %v1189 = vrot.slane %v857, 1
      %v1190 = vrot.slane %v937, 1
      %v1191 = vsel %vm706, %v1189, %v1190
      %v1192 = vrot.slane %v858, 1
      %v1193 = vrot.slane %v938, 1
      %v1194 = vsel %vm706, %v1192, %v1193
      %v1195 = vrot.slane %v859, 1
      %v1196 = vrot.slane %v939, 1
      %v1197 = vsel %vm706, %v1195, %v1196
      %v1198 = vrot.slane %v860, 1
      %v1199 = vrot.slane %v940, 1
      %v1200 = vsel %vm706, %v1198, %v1199
      %v1201 = vrot.slane %v861, 1
      %v1202 = vrot.slane %v941, 1
      %v1203 = vsel %vm706, %v1201, %v1202
      %v1204 = vrot.slane %v862, 1
      %v1205 = vrot.slane %v942, 1
      %v1206 = vsel %vm706, %v1204, %v1205
      %v1207 = vrot.slane %v863, 1
      %v1208 = vrot.slane %v943, 1
      %v1209 = vsel %vm706, %v1207, %v1208
      %v1210 = vrot.slane %v864, 1
      %v1211 = vrot.slane %v944, 1
      %v1212 = vsel %vm706, %v1210, %v1211
      %v1213 = vrot.slane %v865, 1
      %v1214 = vrot.slane %v945, 1
      %v1215 = vsel %vm706, %v1213, %v1214
      %v1216 = vrot.slane %v866, 1
      %v1217 = vrot.slane %v946, 1
      %v1218 = vsel %vm706, %v1216, %v1217
      %1219 = vrot.lane.b32.xlu0 %v1173, 20
      %v1220 = vpop.permute.xlu0 %1219
      %1221 = vrot.lane.b32.xlu0 %v1176, 20
      %v1222 = vpop.permute.xlu0 %1221
      %1223 = vrot.lane.b32.xlu0 %v1179, 20
      %v1224 = vpop.permute.xlu0 %1223
      %1225 = vrot.lane.b32.xlu0 %v1182, 20
      %v1226 = vpop.permute.xlu0 %1225
      %1227 = vrot.lane.b32.xlu0 %v1185, 20
      %v1228 = vpop.permute.xlu0 %1227
      %1229 = vrot.lane.b32.xlu0 %v1188, 20
      %v1230 = vpop.permute.xlu0 %1229
      %1231 = vrot.lane.b32.xlu0 %v1191, 20
      %v1232 = vpop.permute.xlu0 %1231
      %1233 = vrot.lane.b32.xlu0 %v1194, 20
      %v1234 = vpop.permute.xlu0 %1233
      %1235 = vrot.lane.b32.xlu0 %v1197, 20
      %v1236 = vpop.permute.xlu0 %1235
      %1237 = vrot.lane.b32.xlu0 %v1200, 20
      %v1238 = vpop.permute.xlu0 %1237
      %1239 = vrot.lane.b32.xlu0 %v1203, 20
      %v1240 = vpop.permute.xlu0 %1239
      %1241 = vrot.lane.b32.xlu0 %v1206, 20
      %v1242 = vpop.permute.xlu0 %1241
      %1243 = vrot.lane.b32.xlu0 %v1209, 20
      %v1244 = vpop.permute.xlu0 %1243
      %1245 = vrot.lane.b32.xlu0 %v1212, 20
      %v1246 = vpop.permute.xlu0 %1245
      %1247 = vrot.lane.b32.xlu0 %v1215, 20
      %v1248 = vpop.permute.xlu0 %1247
      %1249 = vrot.lane.b32.xlu0 %v1218, 20
      %v1250 = vpop.permute.xlu0 %1249
      %v1283 = vunpack.c.l.b16 %v305
      %v1284 = vunpack.c.l.b16 %v306
      %v1285 = vunpack.c.l.b16 %v308
      %v1286 = vunpack.c.l.b16 %v309
      %v1287 = vunpack.c.l.b16 %v311
      %v1288 = vunpack.c.l.b16 %v312
      %v1289 = vunpack.c.l.b16 %v314
      %v1290 = vunpack.c.l.b16 %v315
      %v1291 = vunpack.c.l.b16 %v317
      %v1292 = vunpack.c.l.b16 %v318
      %v1293 = vunpack.c.l.b16 %v320
      %v1294 = vunpack.c.l.b16 %v321
      %v1295 = vunpack.c.l.b16 %v323
      %v1296 = vunpack.c.l.b16 %v324
      %v1297 = vunpack.c.l.b16 %v326
      %v1298 = vunpack.c.l.b16 %v327
      %v1299 = vunpack.c.l.b16 %v329
      %v1300 = vunpack.c.l.b16 %v330
      %v1301 = vunpack.c.l.b16 %v332
      %v1302 = vunpack.c.l.b16 %v333
      %v1303 = vunpack.c.l.b16 %v335
      %v1304 = vunpack.c.l.b16 %v336
      %v1305 = vunpack.c.l.b16 %v338
      %v1306 = vunpack.c.l.b16 %v339
      %v1307 = vunpack.c.l.b16 %v341
      %v1308 = vunpack.c.l.b16 %v342
      %v1309 = vunpack.c.l.b16 %v344
      %v1310 = vunpack.c.l.b16 %v345
      %v1311 = vunpack.c.l.b16 %v347
      %v1312 = vunpack.c.l.b16 %v348
      %v1313 = vunpack.c.l.b16 %v350
      %v1314 = vunpack.c.l.b16 %v351
      %v1315 = vpack.c.b16 %v1284, %v1283
      %v1316 = vpack.c.b16 %v1286, %v1285
      %v1317 = vpack.c.b16 %v1288, %v1287
      %v1318 = vpack.c.b16 %v1290, %v1289
      %v1319 = vpack.c.b16 %v1292, %v1291
      %v1320 = vpack.c.b16 %v1294, %v1293
      %v1321 = vpack.c.b16 %v1296, %v1295
      %v1322 = vpack.c.b16 %v1298, %v1297
      %v1323 = vpack.c.b16 %v1300, %v1299
      %v1324 = vpack.c.b16 %v1302, %v1301
      %v1325 = vpack.c.b16 %v1304, %v1303
      %v1326 = vpack.c.b16 %v1306, %v1305
      %v1327 = vpack.c.b16 %v1308, %v1307
      %v1328 = vpack.c.b16 %v1310, %v1309
      %v1329 = vpack.c.b16 %v1312, %v1311
      %v1330 = vpack.c.b16 %v1314, %v1313
      %1331 = vrot.lane.b32.xlu0 %v1315, 24
      %v1332 = vpop.permute.xlu0 %1331
      %1333 = vrot.lane.b32.xlu0 %v1316, 24
      %v1334 = vpop.permute.xlu0 %1333
      %1335 = vrot.lane.b32.xlu0 %v1317, 24
      %v1336 = vpop.permute.xlu0 %1335
      %1337 = vrot.lane.b32.xlu0 %v1318, 24
      %v1338 = vpop.permute.xlu0 %1337
      %1339 = vrot.lane.b32.xlu0 %v1319, 24
      %v1340 = vpop.permute.xlu0 %1339
      %1341 = vrot.lane.b32.xlu0 %v1320, 24
      %v1342 = vpop.permute.xlu0 %1341
      %1343 = vrot.lane.b32.xlu0 %v1321, 24
      %v1344 = vpop.permute.xlu0 %1343
      %1345 = vrot.lane.b32.xlu0 %v1322, 24
      %v1346 = vpop.permute.xlu0 %1345
      %1347 = vrot.lane.b32.xlu0 %v1323, 24
      %v1348 = vpop.permute.xlu0 %1347
      %1349 = vrot.lane.b32.xlu0 %v1324, 24
      %v1350 = vpop.permute.xlu0 %1349
      %1351 = vrot.lane.b32.xlu0 %v1325, 24
      %v1352 = vpop.permute.xlu0 %1351
      %1353 = vrot.lane.b32.xlu0 %v1326, 24
      %v1354 = vpop.permute.xlu0 %1353
      %1355 = vrot.lane.b32.xlu0 %v1327, 24
      %v1356 = vpop.permute.xlu0 %1355
      %1357 = vrot.lane.b32.xlu0 %v1328, 24
      %v1358 = vpop.permute.xlu0 %1357
      %1359 = vrot.lane.b32.xlu0 %v1329, 24
      %v1360 = vpop.permute.xlu0 %1359
      %1361 = vrot.lane.b32.xlu0 %v1330, 24
      %v1362 = vpop.permute.xlu0 %1361
      %v1379 = vunpack.c.l.b16 %v307
      %v1380 = vunpack.c.l.b16 %v310
      %v1381 = vunpack.c.l.b16 %v313
      %v1382 = vunpack.c.l.b16 %v316
      %v1383 = vunpack.c.l.b16 %v319
      %v1384 = vunpack.c.l.b16 %v322
      %v1385 = vunpack.c.l.b16 %v325
      %v1386 = vunpack.c.l.b16 %v328
      %v1387 = vunpack.c.l.b16 %v331
      %v1388 = vunpack.c.l.b16 %v334
      %v1389 = vunpack.c.l.b16 %v337
      %v1390 = vunpack.c.l.b16 %v340
      %v1391 = vunpack.c.l.b16 %v343
      %v1392 = vunpack.c.l.b16 %v346
      %v1393 = vunpack.c.l.b16 %v349
      %v1394 = vunpack.c.l.b16 %v352
      %v1395 = vpack.c.b16 %v1379, %v1379
      %v1396 = vpack.c.b16 %v1380, %v1380
      %v1397 = vpack.c.b16 %v1381, %v1381
      %v1398 = vpack.c.b16 %v1382, %v1382
      %v1399 = vpack.c.b16 %v1383, %v1383
      %v1400 = vpack.c.b16 %v1384, %v1384
      %v1401 = vpack.c.b16 %v1385, %v1385
      %v1402 = vpack.c.b16 %v1386, %v1386
      %v1403 = vpack.c.b16 %v1387, %v1387
      %v1404 = vpack.c.b16 %v1388, %v1388
      %v1405 = vpack.c.b16 %v1389, %v1389
      %v1406 = vpack.c.b16 %v1390, %v1390
      %v1407 = vpack.c.b16 %v1391, %v1391
      %v1408 = vpack.c.b16 %v1392, %v1392
      %v1409 = vpack.c.b16 %v1393, %v1393
      %v1410 = vpack.c.b16 %v1394, %v1394
      %v1412 = vshrl.u32 %v1315, 16
      %v1414 = vshll.u32 %v1315, 16
      %v1416 = vrot.slane %v1414, 1
      %v1417 = vor.u32 %v1412, %v1416
      %v1419 = vshll.u32 %v1395, 16
      %v1421 = vrot.slane %v1419, 1
      %v1422 = vsel %vm481, %v1417, %v1421
      %v1424 = vshrl.u32 %v1316, 16
      %v1426 = vshll.u32 %v1316, 16
      %v1428 = vrot.slane %v1426, 1
      %v1429 = vor.u32 %v1424, %v1428
      %v1431 = vshll.u32 %v1396, 16
      %v1433 = vrot.slane %v1431, 1
      %v1434 = vsel %vm481, %v1429, %v1433
      %v1436 = vshrl.u32 %v1317, 16
      %v1438 = vshll.u32 %v1317, 16
      %v1440 = vrot.slane %v1438, 1
      %v1441 = vor.u32 %v1436, %v1440
      %v1443 = vshll.u32 %v1397, 16
      %v1445 = vrot.slane %v1443, 1
      %v1446 = vsel %vm481, %v1441, %v1445
      %v1448 = vshrl.u32 %v1318, 16
      %v1450 = vshll.u32 %v1318, 16
      %v1452 = vrot.slane %v1450, 1
      %v1453 = vor.u32 %v1448, %v1452
      %v1455 = vshll.u32 %v1398, 16
      %v1457 = vrot.slane %v1455, 1
      %v1458 = vsel %vm481, %v1453, %v1457
      %v1460 = vshrl.u32 %v1319, 16
      %v1462 = vshll.u32 %v1319, 16
      %v1464 = vrot.slane %v1462, 1
      %v1465 = vor.u32 %v1460, %v1464
      %v1467 = vshll.u32 %v1399, 16
      %v1469 = vrot.slane %v1467, 1
      %v1470 = vsel %vm481, %v1465, %v1469
      %v1472 = vshrl.u32 %v1320, 16
      %v1474 = vshll.u32 %v1320, 16
      %v1476 = vrot.slane %v1474, 1
      %v1477 = vor.u32 %v1472, %v1476
      %v1479 = vshll.u32 %v1400, 16
      %v1481 = vrot.slane %v1479, 1
      %v1482 = vsel %vm481, %v1477, %v1481
      %v1484 = vshrl.u32 %v1321, 16
      %v1486 = vshll.u32 %v1321, 16
      %v1488 = vrot.slane %v1486, 1
      %v1489 = vor.u32 %v1484, %v1488
      %v1491 = vshll.u32 %v1401, 16
      %v1493 = vrot.slane %v1491, 1
      %v1494 = vsel %vm481, %v1489, %v1493
      %v1496 = vshrl.u32 %v1322, 16
      %v1498 = vshll.u32 %v1322, 16
      %v1500 = vrot.slane %v1498, 1
      %v1501 = vor.u32 %v1496, %v1500
      %v1503 = vshll.u32 %v1402, 16
      %v1505 = vrot.slane %v1503, 1
      %v1506 = vsel %vm481, %v1501, %v1505
      %v1508 = vshrl.u32 %v1323, 16
      %v1510 = vshll.u32 %v1323, 16
      %v1512 = vrot.slane %v1510, 1
      %v1513 = vor.u32 %v1508, %v1512
      %v1515 = vshll.u32 %v1403, 16
      %v1517 = vrot.slane %v1515, 1
      %v1518 = vsel %vm481, %v1513, %v1517
      %v1520 = vshrl.u32 %v1324, 16
      %v1522 = vshll.u32 %v1324, 16
      %v1524 = vrot.slane %v1522, 1
      %v1525 = vor.u32 %v1520, %v1524
      %v1527 = vshll.u32 %v1404, 16
      %v1529 = vrot.slane %v1527, 1
      %v1530 = vsel %vm481, %v1525, %v1529
      %v1532 = vshrl.u32 %v1325, 16
      %v1534 = vshll.u32 %v1325, 16
      %v1536 = vrot.slane %v1534, 1
      %v1537 = vor.u32 %v1532, %v1536
      %v1539 = vshll.u32 %v1405, 16
      %v1541 = vrot.slane %v1539, 1
      %v1542 = vsel %vm481, %v1537, %v1541
      %v1544 = vshrl.u32 %v1326, 16
      %v1546 = vshll.u32 %v1326, 16
      %v1548 = vrot.slane %v1546, 1
      %v1549 = vor.u32 %v1544, %v1548
      %v1551 = vshll.u32 %v1406, 16
      %v1553 = vrot.slane %v1551, 1
      %v1554 = vsel %vm481, %v1549, %v1553
      %v1556 = vshrl.u32 %v1327, 16
      %v1558 = vshll.u32 %v1327, 16
      %v1560 = vrot.slane %v1558, 1
      %v1561 = vor.u32 %v1556, %v1560
      %v1563 = vshll.u32 %v1407, 16
      %v1565 = vrot.slane %v1563, 1
      %v1566 = vsel %vm481, %v1561, %v1565
      %v1568 = vshrl.u32 %v1328, 16
      %v1570 = vshll.u32 %v1328, 16
      %v1572 = vrot.slane %v1570, 1
      %v1573 = vor.u32 %v1568, %v1572
      %v1575 = vshll.u32 %v1408, 16
      %v1577 = vrot.slane %v1575, 1
      %v1578 = vsel %vm481, %v1573, %v1577
      %v1580 = vshrl.u32 %v1329, 16
      %v1582 = vshll.u32 %v1329, 16
      %v1584 = vrot.slane %v1582, 1
      %v1585 = vor.u32 %v1580, %v1584
      %v1587 = vshll.u32 %v1409, 16
      %v1589 = vrot.slane %v1587, 1
      %v1590 = vsel %vm481, %v1585, %v1589
      %v1592 = vshrl.u32 %v1330, 16
      %v1594 = vshll.u32 %v1330, 16
      %v1596 = vrot.slane %v1594, 1
      %v1597 = vor.u32 %v1592, %v1596
      %v1599 = vshll.u32 %v1410, 16
      %v1601 = vrot.slane %v1599, 1
      %v1602 = vsel %vm481, %v1597, %v1601
      %1603 = vrot.lane.b32.xlu0 %v1422, 28
      %v1604 = vpop.permute.xlu0 %1603
      %1605 = vrot.lane.b32.xlu0 %v1434, 28
      %v1606 = vpop.permute.xlu0 %1605
      %1607 = vrot.lane.b32.xlu0 %v1446, 28
      %v1608 = vpop.permute.xlu0 %1607
      %1609 = vrot.lane.b32.xlu0 %v1458, 28
      %v1610 = vpop.permute.xlu0 %1609
      %1611 = vrot.lane.b32.xlu0 %v1470, 28
      %v1612 = vpop.permute.xlu0 %1611
      %1613 = vrot.lane.b32.xlu0 %v1482, 28
      %v1614 = vpop.permute.xlu0 %1613
      %1615 = vrot.lane.b32.xlu0 %v1494, 28
      %v1616 = vpop.permute.xlu0 %1615
      %1617 = vrot.lane.b32.xlu0 %v1506, 28
      %v1618 = vpop.permute.xlu0 %1617
      %1619 = vrot.lane.b32.xlu0 %v1518, 28
      %v1620 = vpop.permute.xlu0 %1619
      %1621 = vrot.lane.b32.xlu0 %v1530, 28
      %v1622 = vpop.permute.xlu0 %1621
      %1623 = vrot.lane.b32.xlu0 %v1542, 28
      %v1624 = vpop.permute.xlu0 %1623
      %1625 = vrot.lane.b32.xlu0 %v1554, 28
      %v1626 = vpop.permute.xlu0 %1625
      %1627 = vrot.lane.b32.xlu0 %v1566, 28
      %v1628 = vpop.permute.xlu0 %1627
      %1629 = vrot.lane.b32.xlu0 %v1578, 28
      %v1630 = vpop.permute.xlu0 %1629
      %1631 = vrot.lane.b32.xlu0 %v1590, 28
      %v1632 = vpop.permute.xlu0 %1631
      %1633 = vrot.lane.b32.xlu0 %v1602, 28
      %v1634 = vpop.permute.xlu0 %1633
      %v1635 = vrot.slane %v1315, 1
      %v1636 = vrot.slane %v1395, 1
      %v1637 = vsel %vm706, %v1635, %v1636
      %v1638 = vrot.slane %v1316, 1
      %v1639 = vrot.slane %v1396, 1
      %v1640 = vsel %vm706, %v1638, %v1639
      %v1641 = vrot.slane %v1317, 1
      %v1642 = vrot.slane %v1397, 1
      %v1643 = vsel %vm706, %v1641, %v1642
      %v1644 = vrot.slane %v1318, 1
      %v1645 = vrot.slane %v1398, 1
      %v1646 = vsel %vm706, %v1644, %v1645
      %v1647 = vrot.slane %v1319, 1
      %v1648 = vrot.slane %v1399, 1
      %v1649 = vsel %vm706, %v1647, %v1648
      %v1650 = vrot.slane %v1320, 1
      %v1651 = vrot.slane %v1400, 1
      %v1652 = vsel %vm706, %v1650, %v1651
      %v1653 = vrot.slane %v1321, 1
      %v1654 = vrot.slane %v1401, 1
      %v1655 = vsel %vm706, %v1653, %v1654
      %v1656 = vrot.slane %v1322, 1
      %v1657 = vrot.slane %v1402, 1
      %v1658 = vsel %vm706, %v1656, %v1657
      %v1659 = vrot.slane %v1323, 1
      %v1660 = vrot.slane %v1403, 1
      %v1661 = vsel %vm706, %v1659, %v1660
      %v1662 = vrot.slane %v1324, 1
      %v1663 = vrot.slane %v1404, 1
      %v1664 = vsel %vm706, %v1662, %v1663
      %v1665 = vrot.slane %v1325, 1
      %v1666 = vrot.slane %v1405, 1
      %v1667 = vsel %vm706, %v1665, %v1666
      %v1668 = vrot.slane %v1326, 1
      %v1669 = vrot.slane %v1406, 1
      %v1670 = vsel %vm706, %v1668, %v1669
      %v1671 = vrot.slane %v1327, 1
      %v1672 = vrot.slane %v1407, 1
      %v1673 = vsel %vm706, %v1671, %v1672
      %v1674 = vrot.slane %v1328, 1
      %v1675 = vrot.slane %v1408, 1
      %v1676 = vsel %vm706, %v1674, %v1675
      %v1677 = vrot.slane %v1329, 1
      %v1678 = vrot.slane %v1409, 1
      %v1679 = vsel %vm706, %v1677, %v1678
      %v1680 = vrot.slane %v1330, 1
      %v1681 = vrot.slane %v1410, 1
      %v1682 = vsel %vm706, %v1680, %v1681
      %1683 = vrot.lane.b32.xlu0 %v1637, 32
      %v1684 = vpop.permute.xlu0 %1683
      %1685 = vrot.lane.b32.xlu0 %v1640, 32
      %v1686 = vpop.permute.xlu0 %1685
      %1687 = vrot.lane.b32.xlu0 %v1643, 32
      %v1688 = vpop.permute.xlu0 %1687
      %1689 = vrot.lane.b32.xlu0 %v1646, 32
      %v1690 = vpop.permute.xlu0 %1689
      %1691 = vrot.lane.b32.xlu0 %v1649, 32
      %v1692 = vpop.permute.xlu0 %1691
      %1693 = vrot.lane.b32.xlu0 %v1652, 32
      %v1694 = vpop.permute.xlu0 %1693
      %1695 = vrot.lane.b32.xlu0 %v1655, 32
      %v1696 = vpop.permute.xlu0 %1695
      %1697 = vrot.lane.b32.xlu0 %v1658, 32
      %v1698 = vpop.permute.xlu0 %1697
      %1699 = vrot.lane.b32.xlu0 %v1661, 32
      %v1700 = vpop.permute.xlu0 %1699
      %1701 = vrot.lane.b32.xlu0 %v1664, 32
      %v1702 = vpop.permute.xlu0 %1701
      %1703 = vrot.lane.b32.xlu0 %v1667, 32
      %v1704 = vpop.permute.xlu0 %1703
      %1705 = vrot.lane.b32.xlu0 %v1670, 32
      %v1706 = vpop.permute.xlu0 %1705
      %1707 = vrot.lane.b32.xlu0 %v1673, 32
      %v1708 = vpop.permute.xlu0 %1707
      %1709 = vrot.lane.b32.xlu0 %v1676, 32
      %v1710 = vpop.permute.xlu0 %1709
      %1711 = vrot.lane.b32.xlu0 %v1679, 32
      %v1712 = vpop.permute.xlu0 %1711
      %1713 = vrot.lane.b32.xlu0 %v1682, 32
      %v1714 = vpop.permute.xlu0 %1713
      %vm1715 = vcmask 31744
      %v1717 = vsel %vm1715, %v417, %v675
      %v1719 = vsel %vm1715, %v418, %v677
      %v1721 = vsel %vm1715, %v419, %v679
      %v1723 = vsel %vm1715, %v420, %v681
      %v1725 = vsel %vm1715, %v421, %v683
      %v1727 = vsel %vm1715, %v422, %v685
      %v1729 = vsel %vm1715, %v423, %v687
      %v1731 = vsel %vm1715, %v424, %v689
      %v1733 = vsel %vm1715, %v425, %v691
      %v1735 = vsel %vm1715, %v426, %v693
      %v1737 = vsel %vm1715, %v427, %v695
      %v1739 = vsel %vm1715, %v428, %v697
      %v1741 = vsel %vm1715, %v429, %v699
      %v1743 = vsel %vm1715, %v430, %v701
      %v1745 = vsel %vm1715, %v431, %v703
      %v1747 = vsel %vm1715, %v432, %v705
      %vm1748 = vcmask 64512
      %v1750 = vsel %vm1748, %v1717, %v756
      %v1752 = vsel %vm1748, %v1719, %v758
      %v1754 = vsel %vm1748, %v1721, %v760
      %v1756 = vsel %vm1748, %v1723, %v762
      %v1758 = vsel %vm1748, %v1725, %v764
      %v1760 = vsel %vm1748, %v1727, %v766
      %v1762 = vsel %vm1748, %v1729, %v768
      %v1764 = vsel %vm1748, %v1731, %v770
      %v1766 = vsel %vm1748, %v1733, %v772
      %v1768 = vsel %vm1748, %v1735, %v774
      %v1770 = vsel %vm1748, %v1737, %v776
      %v1772 = vsel %vm1748, %v1739, %v778
      %v1774 = vsel %vm1748, %v1741, %v780
      %v1776 = vsel %vm1748, %v1743, %v782
      %v1778 = vsel %vm1748, %v1745, %v784
      %v1780 = vsel %vm1748, %v1747, %v786
      %vm1781 = vcmask 97280
      %v1783 = vsel %vm1781, %v1750, %v868
      %v1785 = vsel %vm1781, %v1752, %v870
      %v1787 = vsel %vm1781, %v1754, %v872
      %v1789 = vsel %vm1781, %v1756, %v874
      %v1791 = vsel %vm1781, %v1758, %v876
      %v1793 = vsel %vm1781, %v1760, %v878
      %v1795 = vsel %vm1781, %v1762, %v880
      %v1797 = vsel %vm1781, %v1764, %v882
      %v1799 = vsel %vm1781, %v1766, %v884
      %v1801 = vsel %vm1781, %v1768, %v886
      %v1803 = vsel %vm1781, %v1770, %v888
      %v1805 = vsel %vm1781, %v1772, %v890
      %v1807 = vsel %vm1781, %v1774, %v892
      %v1809 = vsel %vm1781, %v1776, %v894
      %v1811 = vsel %vm1781, %v1778, %v896
      %v1813 = vsel %vm1781, %v1780, %v898
      %vm1814 = vcmask 130048
      %v1816 = vsel %vm1814, %v1783, %v1140
      %v1818 = vsel %vm1814, %v1785, %v1142
      %v1820 = vsel %vm1814, %v1787, %v1144
      %v1822 = vsel %vm1814, %v1789, %v1146
      %v1824 = vsel %vm1814, %v1791, %v1148
      %v1826 = vsel %vm1814, %v1793, %v1150
      %v1828 = vsel %vm1814, %v1795, %v1152
      %v1830 = vsel %vm1814, %v1797, %v1154
      %v1832 = vsel %vm1814, %v1799, %v1156
      %v1834 = vsel %vm1814, %v1801, %v1158
      %v1836 = vsel %vm1814, %v1803, %v1160
      %v1838 = vsel %vm1814, %v1805, %v1162
      %v1840 = vsel %vm1814, %v1807, %v1164
      %v1842 = vsel %vm1814, %v1809, %v1166
      %v1844 = vsel %vm1814, %v1811, %v1168
      %v1846 = vsel %vm1814, %v1813, %v1170
      %vm1847 = vcmask 162816
      %v1849 = vsel %vm1847, %v1816, %v1220
      %v1851 = vsel %vm1847, %v1818, %v1222
      %v1853 = vsel %vm1847, %v1820, %v1224
      %v1855 = vsel %vm1847, %v1822, %v1226
      %v1857 = vsel %vm1847, %v1824, %v1228
      %v1859 = vsel %vm1847, %v1826, %v1230
      %v1861 = vsel %vm1847, %v1828, %v1232
      %v1863 = vsel %vm1847, %v1830, %v1234
      %v1865 = vsel %vm1847, %v1832, %v1236
      %v1867 = vsel %vm1847, %v1834, %v1238
      %v1869 = vsel %vm1847, %v1836, %v1240
      %v1871 = vsel %vm1847, %v1838, %v1242
      %v1873 = vsel %vm1847, %v1840, %v1244
      %v1875 = vsel %vm1847, %v1842, %v1246
      %v1877 = vsel %vm1847, %v1844, %v1248
      %v1879 = vsel %vm1847, %v1846, %v1250
      %vm1880 = vcmask 195584
      %v1882 = vsel %vm1880, %v1849, %v1332
      %v1884 = vsel %vm1880, %v1851, %v1334
      %v1886 = vsel %vm1880, %v1853, %v1336
      %v1888 = vsel %vm1880, %v1855, %v1338
      %v1890 = vsel %vm1880, %v1857, %v1340
      %v1892 = vsel %vm1880, %v1859, %v1342
      %v1894 = vsel %vm1880, %v1861, %v1344
      %v1896 = vsel %vm1880, %v1863, %v1346
      %v1898 = vsel %vm1880, %v1865, %v1348
      %v1900 = vsel %vm1880, %v1867, %v1350
      %v1902 = vsel %vm1880, %v1869, %v1352
      %v1904 = vsel %vm1880, %v1871, %v1354
      %v1906 = vsel %vm1880, %v1873, %v1356
      %v1908 = vsel %vm1880, %v1875, %v1358
      %v1910 = vsel %vm1880, %v1877, %v1360
      %v1912 = vsel %vm1880, %v1879, %v1362
      %vm1913 = vcmask 228352
      %v1915 = vsel %vm1913, %v1882, %v1604
      %v1917 = vsel %vm1913, %v1884, %v1606
      %v1919 = vsel %vm1913, %v1886, %v1608
      %v1921 = vsel %vm1913, %v1888, %v1610
      %v1923 = vsel %vm1913, %v1890, %v1612
      %v1925 = vsel %vm1913, %v1892, %v1614
      %v1927 = vsel %vm1913, %v1894, %v1616
      %v1929 = vsel %vm1913, %v1896, %v1618
      %v1931 = vsel %vm1913, %v1898, %v1620
      %v1933 = vsel %vm1913, %v1900, %v1622
      %v1935 = vsel %vm1913, %v1902, %v1624
      %v1937 = vsel %vm1913, %v1904, %v1626
      %v1939 = vsel %vm1913, %v1906, %v1628
      %v1941 = vsel %vm1913, %v1908, %v1630
      %v1943 = vsel %vm1913, %v1910, %v1632
      %v1945 = vsel %vm1913, %v1912, %v1634
      %vm1946 = vcmask 261120
      %v1948 = vsel %vm1946, %v1915, %v1684
      %v1950 = vsel %vm1946, %v1917, %v1686
      %v1952 = vsel %vm1946, %v1919, %v1688
      %v1954 = vsel %vm1946, %v1921, %v1690
      %v1956 = vsel %vm1946, %v1923, %v1692
      %v1958 = vsel %vm1946, %v1925, %v1694
      %v1960 = vsel %vm1946, %v1927, %v1696
      %v1962 = vsel %vm1946, %v1929, %v1698
      %v1964 = vsel %vm1946, %v1931, %v1700
      %v1966 = vsel %vm1946, %v1933, %v1702
      %v1968 = vsel %vm1946, %v1935, %v1704
      %v1970 = vsel %vm1946, %v1937, %v1706
      %v1972 = vsel %vm1946, %v1939, %v1708
      %v1974 = vsel %vm1946, %v1941, %v1710
      %v1976 = vsel %vm1946, %v1943, %v1712
      %v1978 = vsel %vm1946, %v1945, %v1714
      %v1979 = vld [vmem:[%s1] sm:$0xf]
      %v1980 = vld [vmem:[%s1 + $0x4] sm:$0xf]
      %v1981 = vld [vmem:[%s1 + $0x8] sm:$0xf]
      %v1982 = vld [vmem:[%s1 + $0xc] sm:$0xf]
      %v1983 = vld [vmem:[%s1 + $0x10] sm:$0x3]
      %v1984 = vld [vmem:[%s2] sm:$0x1]
      %v1986 = vlaneseq
      %v1987 = vshrl.u32 %v1986, 7
      %v1988 = vsub.s32 0, %v1987
      %v1989 = vrot.slane %v1984, %v1988
      %v1996 = vunpack.c.l.b16 %v1979
      %v1997 = vunpack.c.l.b16 %v1980
      %v1998 = vunpack.c.l.b16 %v1981
      %v1999 = vunpack.c.l.b16 %v1982
      %v2000 = vunpack.c.l.b16 %v1983
      %v2001 = vpack.c.b16 %v1997, %v1996
      %v2002 = vpack.c.b16 %v1999, %v1998
      %v2003 = vpack.c.b16 %v2000, %v2000
      %vm2006 = vcmask 293888
      %v2007 = vsel %vm2006, %v1948, 0
      %v2009 = vsel %vm2006, %v1950, 0
      %v2011 = vsel %vm2006, %v1952, 0
      %v2013 = vsel %vm2006, %v1954, 0
      %v2015 = vsel %vm2006, %v1956, 0
      %v2017 = vsel %vm2006, %v1958, 0
      %v2019 = vsel %vm2006, %v1960, 0
      %v2021 = vsel %vm2006, %v1962, 0
      %v2023 = vsel %vm2006, %v1964, 0
      %v2025 = vsel %vm2006, %v1966, 0
      %v2027 = vsel %vm2006, %v1968, 0
      %v2029 = vsel %vm2006, %v1970, 0
      %v2031 = vsel %vm2006, %v1972, 0
      %v2033 = vsel %vm2006, %v1974, 0
      %v2035 = vsel %vm2006, %v1976, 0
      %v2037 = vsel %vm2006, %v1978, 0
      %vm2039 = vcmask 1041408
      %v2041 = vsel %vm2039, %v2003, 0
      %2043 = vmatprep.subr.bf16.mxu0 0
      %2044 = vmatpush1.bf16.msra.mxu0 0
      %2045 = vmatprep.subr.bf16.mxu0 0
      %2046 = vmatpush1.bf16.msra.mxu0 0
      %2047 = vmatprep.subr.bf16.mxu0 0
      %2048 = vmatpush1.bf16.msra.mxu0 0
      %2049 = vmatprep.subr.bf16.mxu0 0
      %2050 = vmatpush1.bf16.msra.mxu0 0
      %2051 = vmatprep.subr.bf16.mxu0 0
      %2052 = vmatpush1.bf16.msra.mxu0 0
      %2053 = vmatprep.subr.bf16.mxu0 0
      %2054 = vmatpush1.bf16.msra.mxu0 %v2041
      %2055 = vmatprep.subr.bf16.mxu0 0
      %2056 = vmatpush1.bf16.msra.mxu0 %v2002
      %2057 = vmatprep.subr.bf16.mxu0 0
      %2058 = vmatpush1.bf16.msra.mxu0 %v2001
      %2059 = vmatprep.subr.bf16.mxu0 0
      %2060 = vmatpush2.bf16.msra.mxu0 0
      %2061 = vmatprep.subr.bf16.mxu0 0
      %2062 = vmatpush2.bf16.msra.mxu0 0
      %2063 = vmatprep.subr.bf16.mxu0 0
      %2064 = vmatpush2.bf16.msra.mxu0 0
      %2065 = vmatprep.subr.bf16.mxu0 0
      %2066 = vmatpush2.bf16.msra.mxu0 0
      %2067 = vmatprep.subr.bf16.mxu0 0
      %2068 = vmatpush2.bf16.msra.mxu0 0
      %2069 = vmatprep.subr.bf16.mxu0 0
      %2070 = vmatpush2.bf16.msra.mxu0 0
      %2071 = vmatprep.subr.bf16.mxu0 0
      %2072 = vmatpush2.bf16.msra.mxu0 0
      %2073 = vmatprep.subr.bf16.mxu0 0
      %2074 = vmatpush2.bf16.msra.mxu0 0
      %2075 = vmatprep.mubr.bf16.mxu0 0
      %2076 = vmatmul.mubr.bf16.gmra.mxu0 %v2007
      %v2077 = vpop.f32.mrf.mxu0
      %v2078 = vadd.f32 %v1989, %v2077
      %v2079 = vpop.f32.mrf.mxu0
      %v2080 = vpop.f32.mrf.mxu0
      %v2081 = vadd.f32 %v1989, %v2080
      %v2082 = vpop.f32.mrf.mxu0
      %2083 = vmatprep.mubr.bf16.mxu0 0
      %2084 = vmatmul.mubr.bf16.gmra.mxu0 %v2009
      %v2085 = vpop.f32.mrf.mxu0
      %v2086 = vadd.f32 %v1989, %v2085
      %v2087 = vpop.f32.mrf.mxu0
      %v2088 = vpop.f32.mrf.mxu0
      %v2089 = vadd.f32 %v1989, %v2088
      %v2090 = vpop.f32.mrf.mxu0
      %2091 = vmatprep.mubr.bf16.mxu0 0
      %2092 = vmatmul.mubr.bf16.gmra.mxu0 %v2011
      %v2093 = vpop.f32.mrf.mxu0
      %v2094 = vadd.f32 %v1989, %v2093
      %v2095 = vpop.f32.mrf.mxu0
      %v2096 = vpop.f32.mrf.mxu0
      %v2097 = vadd.f32 %v1989, %v2096
      %v2098 = vpop.f32.mrf.mxu0
      %2099 = vmatprep.mubr.bf16.mxu0 0
      %2100 = vmatmul.mubr.bf16.gmra.mxu0 %v2013
      %v2101 = vpop.f32.mrf.mxu0
      %v2102 = vadd.f32 %v1989, %v2101
      %v2103 = vpop.f32.mrf.mxu0
      %v2104 = vpop.f32.mrf.mxu0
      %v2105 = vadd.f32 %v1989, %v2104
      %v2106 = vpop.f32.mrf.mxu0
      %2107 = vmatprep.mubr.bf16.mxu0 0
      %2108 = vmatmul.mubr.bf16.gmra.mxu0 %v2015
      %v2109 = vpop.f32.mrf.mxu0
      %v2110 = vadd.f32 %v1989, %v2109
      %v2111 = vpop.f32.mrf.mxu0
      %v2112 = vpop.f32.mrf.mxu0
      %v2113 = vadd.f32 %v1989, %v2112
      %v2114 = vpop.f32.mrf.mxu0
      %2115 = vmatprep.mubr.bf16.mxu0 0
      %2116 = vmatmul.mubr.bf16.gmra.mxu0 %v2017
      %v2117 = vpop.f32.mrf.mxu0
      %v2118 = vadd.f32 %v1989, %v2117
      %v2119 = vpop.f32.mrf.mxu0
      %v2120 = vpop.f32.mrf.mxu0
      %v2121 = vadd.f32 %v1989, %v2120
      %v2122 = vpop.f32.mrf.mxu0
      %2123 = vmatprep.mubr.bf16.mxu0 0
      %2124 = vmatmul.mubr.bf16.gmra.mxu0 %v2019
      %v2125 = vpop.f32.mrf.mxu0
      %v2126 = vadd.f32 %v1989, %v2125
      %v2127 = vpop.f32.mrf.mxu0
      %v2128 = vpop.f32.mrf.mxu0
      %v2129 = vadd.f32 %v1989, %v2128
      %v2130 = vpop.f32.mrf.mxu0
      %2131 = vmatprep.mubr.bf16.mxu0 0
      %2132 = vmatmul.mubr.bf16.gmra.mxu0 %v2021
      %v2133 = vpop.f32.mrf.mxu0
      %v2134 = vadd.f32 %v1989, %v2133
      %v2135 = vpop.f32.mrf.mxu0
      %v2136 = vpop.f32.mrf.mxu0
      %v2137 = vadd.f32 %v1989, %v2136
      %v2138 = vpop.f32.mrf.mxu0
      %2139 = vmatprep.mubr.bf16.mxu0 0
      %2140 = vmatmul.mubr.bf16.gmra.mxu0 %v2023
      %v2141 = vpop.f32.mrf.mxu0
      %v2142 = vadd.f32 %v1989, %v2141
      %v2143 = vpop.f32.mrf.mxu0
      %v2144 = vpop.f32.mrf.mxu0
      %v2145 = vadd.f32 %v1989, %v2144
      %v2146 = vpop.f32.mrf.mxu0
      %2147 = vmatprep.mubr.bf16.mxu0 0
      %2148 = vmatmul.mubr.bf16.gmra.mxu0 %v2025
      %v2149 = vpop.f32.mrf.mxu0
      %v2150 = vadd.f32 %v1989, %v2149
      %v2151 = vpop.f32.mrf.mxu0
      %v2152 = vpop.f32.mrf.mxu0
      %v2153 = vadd.f32 %v1989, %v2152
      %v2154 = vpop.f32.mrf.mxu0
      %2155 = vmatprep.mubr.bf16.mxu0 0
      %2156 = vmatmul.mubr.bf16.gmra.mxu0 %v2027
      %v2157 = vpop.f32.mrf.mxu0
      %v2158 = vadd.f32 %v1989, %v2157
      %v2159 = vpop.f32.mrf.mxu0
      %v2160 = vpop.f32.mrf.mxu0
      %v2161 = vadd.f32 %v1989, %v2160
      %v2162 = vpop.f32.mrf.mxu0
      %2163 = vmatprep.mubr.bf16.mxu0 0
      %2164 = vmatmul.mubr.bf16.gmra.mxu0 %v2029
      %v2165 = vpop.f32.mrf.mxu0
      %v2166 = vadd.f32 %v1989, %v2165
      %v2167 = vpop.f32.mrf.mxu0
      %v2168 = vpop.f32.mrf.mxu0
      %v2169 = vadd.f32 %v1989, %v2168
      %v2170 = vpop.f32.mrf.mxu0
      %2171 = vmatprep.mubr.bf16.mxu0 0
      %2172 = vmatmul.mubr.bf16.gmra.mxu0 %v2031
      %v2173 = vpop.f32.mrf.mxu0
      %v2174 = vadd.f32 %v1989, %v2173
      %v2175 = vpop.f32.mrf.mxu0
      %v2176 = vpop.f32.mrf.mxu0
      %v2177 = vadd.f32 %v1989, %v2176
      %v2178 = vpop.f32.mrf.mxu0
      %2179 = vmatprep.mubr.bf16.mxu0 0
      %2180 = vmatmul.mubr.bf16.gmra.mxu0 %v2033
      %v2181 = vpop.f32.mrf.mxu0
      %v2182 = vadd.f32 %v1989, %v2181
      %v2183 = vpop.f32.mrf.mxu0
      %v2184 = vpop.f32.mrf.mxu0
      %v2185 = vadd.f32 %v1989, %v2184
      %v2186 = vpop.f32.mrf.mxu0
      %2187 = vmatprep.mubr.bf16.mxu0 0
      %2188 = vmatmul.mubr.bf16.gmra.mxu0 %v2035
      %v2189 = vpop.f32.mrf.mxu0
      %v2190 = vadd.f32 %v1989, %v2189
      %v2191 = vpop.f32.mrf.mxu0
      %v2192 = vpop.f32.mrf.mxu0
      %v2193 = vadd.f32 %v1989, %v2192
      %v2194 = vpop.f32.mrf.mxu0
      %2195 = vmatprep.mubr.bf16.mxu0 0
      %2196 = vmatmul.mubr.bf16.gmra.mxu0 %v2037
      %v2197 = vpop.f32.mrf.mxu0
      %v2198 = vadd.f32 %v1989, %v2197
      %v2199 = vpop.f32.mrf.mxu0
      %v2200 = vpop.f32.mrf.mxu0
      %v2201 = vadd.f32 %v1989, %v2200
      %v2202 = vpop.f32.mrf.mxu0
      %2203 = vdwg.mxu0
      %2204 = vst.msk [vmem:[%s194] sm:$0xff] %vm1748, %v2078
      %2205 = vst.msk [vmem:[%s194 + $0x8] sm:$0xff] %vm1748, %v2081
      %2206 = vst.msk [vmem:[%s194 + $0x10] sm:$0xff] %vm1748, %v2086
      %2207 = vst.msk [vmem:[%s194 + $0x18] sm:$0xff] %vm1748, %v2089
      %2208 = vst.msk [vmem:[%s194 + $0x20] sm:$0xff] %vm1748, %v2094
      %2209 = vst.msk [vmem:[%s194 + $0x28] sm:$0xff] %vm1748, %v2097
      %2210 = vst.msk [vmem:[%s194 + $0x30] sm:$0xff] %vm1748, %v2102
      %2211 = vst.msk [vmem:[%s194 + $0x38] sm:$0xff] %vm1748, %v2105
      %2212 = vst.msk [vmem:[%s194 + $0x40] sm:$0xff] %vm1748, %v2110
      %2213 = vst.msk [vmem:[%s194 + $0x48] sm:$0xff] %vm1748, %v2113
      %2214 = vst.msk [vmem:[%s194 + $0x50] sm:$0xff] %vm1748, %v2118
      %2215 = vst.msk [vmem:[%s194 + $0x58] sm:$0xff] %vm1748, %v2121
      %2216 = vst.msk [vmem:[%s194 + $0x60] sm:$0xff] %vm1748, %v2126
      %2217 = vst.msk [vmem:[%s194 + $0x68] sm:$0xff] %vm1748, %v2129
      %2218 = vst.msk [vmem:[%s194 + $0x70] sm:$0xff] %vm1748, %v2134
      %2219 = vst.msk [vmem:[%s194 + $0x78] sm:$0xff] %vm1748, %v2137
      %2220 = vst.msk [vmem:[%s194 + $0x80] sm:$0xff] %vm1748, %v2142
      %2221 = vst.msk [vmem:[%s194 + $0x88] sm:$0xff] %vm1748, %v2145
      %2222 = vst.msk [vmem:[%s194 + $0x90] sm:$0xff] %vm1748, %v2150
      %2223 = vst.msk [vmem:[%s194 + $0x98] sm:$0xff] %vm1748, %v2153
      %2224 = vst.msk [vmem:[%s194 + $0xa0] sm:$0xff] %vm1748, %v2158
      %2225 = vst.msk [vmem:[%s194 + $0xa8] sm:$0xff] %vm1748, %v2161
      %2226 = vst.msk [vmem:[%s194 + $0xb0] sm:$0xff] %vm1748, %v2166
      %2227 = vst.msk [vmem:[%s194 + $0xb8] sm:$0xff] %vm1748, %v2169
      %2228 = vst.msk [vmem:[%s194 + $0xc0] sm:$0xff] %vm1748, %v2174
      %2229 = vst.msk [vmem:[%s194 + $0xc8] sm:$0xff] %vm1748, %v2177
      %2230 = vst.msk [vmem:[%s194 + $0xd0] sm:$0xff] %vm1748, %v2182
      %2231 = vst.msk [vmem:[%s194 + $0xd8] sm:$0xff] %vm1748, %v2185
      %2232 = vst.msk [vmem:[%s194 + $0xe0] sm:$0xff] %vm1748, %v2190
      %2233 = vst.msk [vmem:[%s194 + $0xe8] sm:$0xff] %vm1748, %v2193
      %2234 = vst.msk [vmem:[%s194 + $0xf0] sm:$0xff] %vm1748, %v2198
      %2235 = vst.msk [vmem:[%s194 + $0xf8] sm:$0xff] %vm1748, %v2201
      %s2236 = smul.u32 16, %s19
      %p2237 = scmp.lt.s32.totalorder %s18, 1
      %s2238 = scalar_select %p2237, %s18, 1
      %p2239 = scmp.lt.s32.totalorder %s2236, 15
      %s2240 = scalar_select %p2239, %s2236, 15
      %s2241 = smul.addr %s2240, 2
      %s2242 = smul.addr %s2238, 32
      %s2243 = sadd.s32 %s2241, %s2242
      %s2244 = smul.addr %s2243, 8
      %s2245 = scalar_lea.vmem %s3, %s2244
      // Predicated region
      $region33: #{convbn_forward.1} parent=31 // pred_check
        %p2246 = pneg %p114
      $region34: #{convbn_forward.1} parent=31 // pred_check_branch
        %2248 = sbr.rel (%p2246) target = $region36
      $region35: #{convbn_forward.1} parent=31 // pred_region
        %s2249 = smul.u32 16, %s19
      $region36: #{convbn_forward.1} parent=31 // pred_fallthru
        _
    $region32: #{convbn_forward.1} parent=5 // pred_fallthru
      _
    %p2250 = scmp.le.s32.totalorder 2, %s9
    // Predicated region
    $region37: #{convbn_forward.1} parent=5 // pred_check
      %p2251 = pneg %p2250
    $region38: #{convbn_forward.1} parent=5 // pred_check_branch
      %2253 = sbr.rel (%p2251) target = $region40
    $region39: #{convbn_forward.1} parent=5 // pred_region
      %s2254 = ssub.s32 %s9, 2
      // Predicated region
      $region41: #{convbn_forward.1} parent=39 // pred_check
        %p2255 = pneg %p120
      $region42: #{convbn_forward.1} parent=39 // pred_check_branch
        %2257 = sbr.rel (%p2255) target = $region44
      $region43: #{convbn_forward.1} parent=39 // pred_region
        %s2258 = smul.u32 16, %s21
        %p2259 = scmp.lt.s32.totalorder %s20, 1
        %s2260 = scalar_select %p2259, %s20, 1
        %p2261 = scmp.lt.s32.totalorder %s2258, 15
        %s2262 = scalar_select %p2261, %s2258, 15
        %s2263 = smul.addr %s2262, 2
        %s2264 = smul.addr %s2260, 32
        %s2265 = sadd.s32 %s2263, %s2264
        %s2266 = smul.addr %s2265, 8
        %s2267 = scalar_lea.vmem %s3, %s2266
      $region44: #{convbn_forward.1} parent=39 // pred_fallthru
        _
    $region40: #{convbn_forward.1} parent=5 // pred_fallthru
      _
  $region6: #{convbn_forward.1} parent=0 // loop_footer
    %s13 = sadd.s32 1, %s9
  $region7: #{convbn_forward.1} parent=0 // loop_footer_branch
    %8 = sbr.rel target = $region3
  $region8: #{convbn_forward.1} parent=0 // loop_exit
    _

</llo_original>
